<compile_context>
chip_gen: v5e
topology: v5e:2x2
jax: 0.10.0
libtpu: 0.0.40
codegen_flags: <defaults>
</compile_context>

<pallas_src>
import functools
import math
import numpy as np
import jax
import jax.numpy as jnp
from jax.experimental import pallas as pl
from jax.experimental.pallas import tpu as pltpu

NHID = 32                    # config['nhid']
HEADS = 4                    # num_heads
HEAD_DIM = NHID // HEADS     # out_feats = nhid // 4
PROP = 2                     # config['prop']
LN_EPS = 1e-5                # torch.nn.LayerNorm default eps
ATTN_SCALE = 1.0 / math.sqrt(HEADS * HEAD_DIM)   # / sqrt(out_feats * num_heads)
MASK_BIAS = 1e30


def _device_kind():
    try:
        return jax.devices()[0].device_kind.lower()
    except Exception:
        return ""


def _softmax_exp_dtype():
    # bf16 exp only pays off on chips with a bf16 VPU/EUP path (v6e / v7x);
    # on v5e and older it just adds converts, so keep f32 there.
    kind = _device_kind()
    return jnp.bfloat16 if ("v6" in kind or "v7" in kind or "tpu7" in kind) else jnp.float32


def _vmem_limit_bytes():
    # Generation-aware scoped-VMEM request; leave headroom for internal scratch.
    kind = _device_kind()
    phys = 64 * 2**20 if ("v7" in kind or "tpu7" in kind) else 128 * 2**20
    return int(phys * 3 // 4)


def _layernorm(x, gamma, beta):
    mu = jnp.mean(x, axis=-1, keepdims=True)
    var = jnp.mean(jnp.square(x - mu), axis=-1, keepdims=True)
    return (x - mu) * jax.lax.rsqrt(var + LN_EPS) * gamma + beta


# ---------------------------------------------------------------------------
# Fused multi-layer GAT propagation kernel
# ---------------------------------------------------------------------------
def gat_prop_kernel(feat_hbm, adj_ref, wq_ref, wkv_ref, w1_ref, w2_ref, small_ref,
                    out_ref, feats_scr, kT_scr, v_scr, *, exp_dtype):
    l = pl.program_id(0)          # layer index
    i = pl.program_id(1)          # destination-row block index
    last_layer = pl.num_programs(0) - 1
    tile_m = out_ref.shape[0]

    # --- once per layer: fused k/v projection of the FULL node table (bf16 MXU) ---
    @pl.when(i == 0)
    def _layer_setup():
        @pl.when(l == 0)
        def _load_input():
            # feats arrives as a raw HBM ref (pl.ANY): consumed exactly once, so it never
            # pins an auto-pipelined VMEM window for the whole kernel.
            pltpu.sync_copy(feat_hbm, feats_scr)
        f_bf = feats_scr[...].astype(jnp.bfloat16)
        kv = jnp.dot(f_bf, wkv_ref[0], preferred_element_type=jnp.float32)   # [N, 2*NHID]
        k_t = jnp.transpose(kv[:, :NHID])            # one XLU transpose per layer, [NHID, N]
        for h in range(HEADS):                       # per-head lane-dense (8, N) slabs
            kT_scr[h] = k_t[h * HEAD_DIM:(h + 1) * HEAD_DIM, :].astype(jnp.bfloat16)
        v_scr[...] = kv[:, NHID:].astype(jnp.bfloat16)

    start = pl.multiple_of(i * tile_m, tile_m)

    if adj_ref.shape[0] == tile_m:                   # streamed (tile_m, N) int8 rows
        adj_rows = adj_ref[...]
    else:                                            # VMEM-resident full adjacency
        adj_rows = adj_ref[pl.ds(start, tile_m), :]
    # Additive mask bias, computed once per block and shared by all heads:
    # 0 on edges, -1e30 on non-edges.  exp(e - m) underflows to exactly 0 on masked lanes
    # of any row with >= 1 edge (self-loops guarantee this for valid nodes), so no second
    # select is needed; all-padding rows rely on the 1e-20 denominator clamp and are never
    # consumed downstream.
    neg_bias = (adj_rows.astype(jnp.float32) - 1.0) * MASK_BIAS

    f_blk = feats_scr[pl.ds(start, tile_m), :]       # [TM, NHID] f32 (also residual input)
    # q projected per block (never for the full table); ATTN_SCALE folded into Wq on host.
    q_bf = jnp.dot(f_blk.astype(jnp.bfloat16), wq_ref[0],
                   preferred_element_type=jnp.float32).astype(jnp.bfloat16)

    head_outs = []
    for h in range(HEADS):                           # static, unrolled
        sl = slice(h * HEAD_DIM, (h + 1) * HEAD_DIM)
        # e[dst, src] = q_dst . k_src   (fn_u_dot_v('el','er','e')), plain [TM,8]x[8,N]
        e = jnp.dot(q_bf[:, sl], kT_scr[h],
                    preferred_element_type=jnp.float32) + neg_bias
        m = jnp.max(e, axis=-1, keepdims=True)
        p = jnp.exp((e - m).astype(exp_dtype))       # edge_softmax numerator per destination
        s = jnp.sum(p.astype(jnp.float32), axis=-1, keepdims=True)
        inv = pl.reciprocal(jnp.maximum(s, 1e-20), approx=True)   # EUP approx reciprocal
        # fn_u_mul_e + fn_sum: aggregation at HEAD_DIM matmul width, normalization folded in
        oh = jnp.dot(p.astype(jnp.bfloat16), v_scr[:, sl],
                     preferred_element_type=jnp.float32) * inv
        head_outs.append(oh)
    ft2 = jnp.concatenate(head_outs, axis=-1)        # [TM, NHID]

    sp = small_ref[0]                                # packed 1-row params, [8, 128]
    b1, alpha = sp[0:1, :], sp[1:2, :]
    b2, g1, bt1 = sp[2:3, :NHID], sp[3:4, :NHID], sp[4:5, :NHID]

    rst = _layernorm(ft2 + f_blk, g1, bt1)           # ln1
    hid = jnp.dot(rst.astype(jnp.bfloat16), w1_ref[0],
                  preferred_element_type=jnp.float32) + b1
    hid = jnp.where(hid >= 0.0, hid, alpha * hid)    # PReLU (per-channel)
    ffn = jnp.dot(hid.astype(jnp.bfloat16), w2_ref[0],
                  preferred_element_type=jnp.float32) + b2
    new = _layernorm(rst + ffn, g1, bt1)             # module reuses ln1

    feats_scr[pl.ds(start, tile_m), :] = new         # carry into the next layer

    @pl.when(l == last_layer)
    def _store():                                    # only the final layer stores to HBM
        out_ref[...] = new


def gat_propagate(feats, adj_i8, packed, *, tile_m=128, adj_resident=None):
    """Run all PROP GAT layers in one pallas_call."""
    n_pad, nhid = feats.shape
    assert nhid == NHID
    tile_m = min(tile_m, n_pad)
    assert n_pad % tile_m == 0
    assert tile_m % 32 == 0 or tile_m == n_pad       # int8 adjacency sublane tiling
    n_layers = packed['wq'].shape[0]
    grid = (n_layers, n_pad // tile_m)

    if adj_resident is None:
        # Residency trades VMEM for per-layer HBM re-streaming; worth it when the
        # (double-buffered) dense int8 adjacency fits comfortably.
        adj_resident = 2 * n_pad * n_pad <= 24 * 2**20

    def layer_spec(arr):   # per-layer stacked parameter, indexed by the layer grid axis
        return pl.BlockSpec((1,) + arr.shape[1:], lambda l, i: (l, 0, 0))

    if adj_resident:
        adj_spec = pl.BlockSpec((n_pad, n_pad), lambda l, i: (0, 0))    # loaded once
    else:
        adj_spec = pl.BlockSpec((tile_m, n_pad), lambda l, i: (i, 0))   # streamed rows

    in_specs = [
        pl.BlockSpec(memory_space=pl.ANY),           # feats: raw HBM ref, DMA'd once
        adj_spec,
        layer_spec(packed['wq']), layer_spec(packed['wkv']),
        layer_spec(packed['w1']), layer_spec(packed['w2']),
        layer_spec(packed['small']),
    ]
    out_spec = pl.BlockSpec((tile_m, NHID), lambda l, i: (i, 0))
    scratch = [
        pltpu.VMEM((n_pad, NHID), jnp.float32),              # features carried across layers
        pltpu.VMEM((HEADS, HEAD_DIM, n_pad), jnp.bfloat16),  # k^T per head (lane-dense in N)
        pltpu.VMEM((n_pad, NHID), jnp.bfloat16),             # v
    ]
    kernel = functools.partial(gat_prop_kernel, exp_dtype=_softmax_exp_dtype())
    return pl.pallas_call(
        kernel,
        out_shape=jax.ShapeDtypeStruct((n_pad, NHID), jnp.float32),
        grid_spec=pltpu.PrefetchScalarGridSpec(
            num_scalar_prefetch=0, grid=grid,
            in_specs=in_specs, out_specs=out_spec, scratch_shapes=scratch),
        compiler_params=pltpu.CompilerParams(
            dimension_semantics=("arbitrary", "arbitrary"),
            vmem_limit_bytes=_vmem_limit_bytes()),
    )(feats, adj_i8, packed['wq'], packed['wkv'], packed['w1'], packed['w2'],
      packed['small'])


# ---------------------------------------------------------------------------
# Parameters
# ---------------------------------------------------------------------------
def init_gat_params(key):
    ks = jax.random.split(key, 5)
    s1 = 1.0 / math.sqrt(NHID)
    s2 = 1.0 / math.sqrt(4 * NHID)
    return dict(
        wq=jax.random.normal(ks[0], (NHID, NHID), jnp.float32) * s1,
        wk=jax.random.normal(ks[1], (NHID, NHID), jnp.float32) * s1,
        wv=jax.random.normal(ks[2], (NHID, NHID), jnp.float32) * s1,
        w1=jax.random.normal(ks[3], (NHID, 4 * NHID), jnp.float32) * s1,
        b1=jnp.zeros((1, 4 * NHID), jnp.float32),
        alpha=jnp.full((1, 4 * NHID), 0.25, jnp.float32),        # PReLU default init
        w2=jax.random.normal(ks[4], (4 * NHID, NHID), jnp.float32) * s2,
        b2=jnp.zeros((1, NHID), jnp.float32),
        g1=jnp.ones((1, NHID), jnp.float32),                     # ln1 (ln2 unused in forward)
        bt1=jnp.zeros((1, NHID), jnp.float32),
    )


def pack_params(params_list):
    """Stack per-layer params; fold ATTN_SCALE into Wq; fuse Wk|Wv; bf16 matmul weights;
    pack all 1-row params into a single (L, 8, 128) f32 array."""
    L = len(params_list)
    wq = jnp.stack([p['wq'] * ATTN_SCALE for p in params_list]).astype(jnp.bfloat16)
    wkv = jnp.stack([jnp.concatenate([p['wk'], p['wv']], axis=1)
                     for p in params_list]).astype(jnp.bfloat16)         # [L, NHID, 2*NHID]
    w1 = jnp.stack([p['w1'] for p in params_list]).astype(jnp.bfloat16)
    w2 = jnp.stack([p['w2'] for p in params_list]).astype(jnp.bfloat16)
    small = np.zeros((L, 8, 128), np.float32)
    for i, p in enumerate(params_list):
        small[i, 0, :4 * NHID] = np.asarray(p['b1']).reshape(-1)
        small[i, 1, :4 * NHID] = np.asarray(p['alpha']).reshape(-1)
        small[i, 2, :NHID] = np.asarray(p['b2']).reshape(-1)
        small[i, 3, :NHID] = np.asarray(p['g1']).reshape(-1)
        small[i, 4, :NHID] = np.asarray(p['bt1']).reshape(-1)
    return dict(wq=wq, wkv=wkv, w1=w1, w2=w2, small=jnp.asarray(small))


# ---------------------------------------------------------------------------
# Pure-JAX reference (no Pallas) mirroring the kernel numerics (bf16 matmul operands,
# additive mask bias, same exp dtype; exact division instead of approx reciprocal).
# ---------------------------------------------------------------------------
def gat_layer_ref(feat, adj_i8, p, exp_dtype):
    bf = jnp.bfloat16
    fb = feat.astype(bf)
    q = jnp.dot(fb, (p['wq'] * ATTN_SCALE).astype(bf),
                preferred_element_type=jnp.float32).astype(bf)
    k = jnp.dot(fb, p['wk'].astype(bf), preferred_element_type=jnp.float32).astype(bf)
    v = jnp.dot(fb, p['wv'].astype(bf), preferred_element_type=jnp.float32).astype(bf)
    neg_bias = (adj_i8.astype(jnp.float32) - 1.0) * MASK_BIAS
    heads = []
    for h in range(HEADS):
        sl = slice(h * HEAD_DIM, (h + 1) * HEAD_DIM)
        e = jnp.dot(q[:, sl], k[:, sl].T, preferred_element_type=jnp.float32) + neg_bias
        m = jnp.max(e, axis=-1, keepdims=True)
        pp = jnp.exp((e - m).astype(exp_dtype))
        den = jnp.maximum(jnp.sum(pp.astype(jnp.float32), axis=-1, keepdims=True), 1e-20)
        heads.append(jnp.dot(pp.astype(bf), v[:, sl],
                             preferred_element_type=jnp.float32) / den)
    ft2 = jnp.concatenate(heads, axis=-1)
    rst = _layernorm(ft2 + feat, p['g1'], p['bt1'])
    hid = jnp.dot(rst.astype(bf), p['w1'].astype(bf),
                  preferred_element_type=jnp.float32) + p['b1']
    hid = jnp.where(hid >= 0.0, hid, p['alpha'] * hid)
    ffn = jnp.dot(hid.astype(bf), p['w2'].astype(bf),
                  preferred_element_type=jnp.float32) + p['b2']
    return _layernorm(rst + ffn, p['g1'], p['bt1'])


# ---------------------------------------------------------------------------
# GraphTrans.forward host-side glue
# ---------------------------------------------------------------------------
def graph_trans_forward(ent, ent_mask, ent_len, rel, rel_mask, adj_i8,
                        root_ids, ent_node_ids, params_list, *,
                        use_pallas=True, tile_m=128, adj_resident=None):
    # ent_mask/rel_mask: 0 = valid token (module does `mask == 0` then boolean-selects).
    # TODO(synk): data-dependent boolean gather / DGL batched-graph construction,
    # filter_nodes(type==...) and pad(..., out_type='tensor') are host-side glue here.
    ent_keep = np.asarray(ent_mask) == 0
    rel_keep = np.asarray(rel_mask) == 0
    pieces = []
    for b in range(ent.shape[0]):
        pieces.append(ent[b][np.nonzero(ent_keep[b])[0]])
        pieces.append(rel[b][np.nonzero(rel_keep[b])[0]])
    init_h = jnp.concatenate(pieces, axis=0)            # DGL batched node order
    n_nodes = init_h.shape[0]
    n_pad = adj_i8.shape[0]
    feats = jnp.zeros((n_pad, NHID), jnp.float32).at[:n_nodes].set(init_h)

    if use_pallas:
        feats = gat_propagate(feats, adj_i8, pack_params(params_list),
                              tile_m=tile_m, adj_resident=adj_resident)
    else:
        exp_dtype = _softmax_exp_dtype()
        for p in params_list:
            feats = gat_layer_ref(feats, adj_i8, p, exp_dtype)

    g_root = feats[np.asarray(root_ids)]                 # nodes with type == root
    max_len = int(max(ent_len))
    g_ent = jnp.zeros((ent.shape[0], max_len, NHID), jnp.float32)
    for b, ids in enumerate(ent_node_ids):                # split(ent_len) + pad -> tensor
        g_ent = g_ent.at[b, :len(ids)].set(feats[np.asarray(ids)])
    return g_ent, g_root


if __name__ == "__main__":
    key = jax.random.PRNGKey(0)
    k_ent, k_rel, k_p = jax.random.split(key, 3)

    B = 2
    ent_valid = [4, 3]        # valid rows of `ent` per graph (root + entities)
    rel_valid = [2, 2]        # valid rows of `rel` per graph
    ent_len = [3, 2]          # number of entity nodes per graph (what g_ent is split by)
    MAX_ENT, MAX_REL = 5, 3

    ent = jax.random.normal(k_ent, (B, MAX_ENT, NHID), jnp.float32)
    rel = jax.random.normal(k_rel, (B, MAX_REL, NHID), jnp.float32)
    ent_mask = np.ones((B, MAX_ENT), np.int32)
    rel_mask = np.ones((B, MAX_REL), np.int32)
    for b in range(B):
        ent_mask[b, :ent_valid[b]] = 0
        rel_mask[b, :rel_valid[b]] = 0

    # Synthetic batched graph (dense int8 adjacency), node order matches init_h construction:
    # per graph: [root, entity_1..k, relation_1..m]; block-diagonal across the batch.
    N_PAD = 64                 # pad rows so the row-block grid (TILE_M=32) has 2 blocks
    TILE_M = 32
    adj = np.zeros((N_PAD, N_PAD), np.int8)
    root_ids, ent_node_ids = [], []
    off = 0
    for b in range(B):
        n_e, n_r = ent_valid[b], rel_valid[b]
        root = off
        ents = list(range(off + 1, off + n_e))
        rels = list(range(off + n_e, off + n_e + n_r))
        root_ids.append(root)
        ent_node_ids.append(ents)
        for n in range(off, off + n_e + n_r):
            adj[n, n] = 1                                # self loop
            adj[n, root] = 1                             # root -> n
            adj[root, n] = 1                             # n -> root
        for idx, e_n in enumerate(ents):                 # entity <-> relation edges
            r_n = rels[idx % n_r]
            adj[e_n, r_n] = 1
            adj[r_n, e_n] = 1
        off += n_e + n_r
    adj_pad = jnp.asarray(adj)                           # int8: 4x less HBM/VMEM than f32

    params_list = [init_gat_params(pk) for pk in jax.random.split(k_p, PROP)]

    # Pallas kernel, both adjacency paths (resident + streamed).
    g_ent, g_root = graph_trans_forward(ent, ent_mask, ent_len, rel, rel_mask,
                                        adj_pad, root_ids, ent_node_ids, params_list,
                                        use_pallas=True, tile_m=TILE_M, adj_resident=True)
    jax.block_until_ready((g_ent, g_root))
    g_ent_s, g_root_s = graph_trans_forward(ent, ent_mask, ent_len, rel, rel_mask,
                                            adj_pad, root_ids, ent_node_ids, params_list,
                                            use_pallas=True, tile_m=TILE_M,
                                            adj_resident=False)
    jax.block_until_ready((g_ent_s, g_root_s))

    # Sanity check against pure-JAX reference with matching (bf16-operand) numerics.
    # Known deviation: pl.reciprocal(approx=True) vs exact division in edge_softmax.
    g_ent_ref, g_root_ref = graph_trans_forward(ent, ent_mask, ent_len, rel, rel_mask,
                                                adj_pad, root_ids, ent_node_ids, params_list,
                                                use_pallas=False)
    assert np.all(np.isfinite(np.asarray(g_ent))) and np.all(np.isfinite(np.asarray(g_root)))
    assert np.allclose(np.asarray(g_ent), np.asarray(g_ent_ref), rtol=2e-2, atol=2e-2)
    assert np.allclose(np.asarray(g_root), np.asarray(g_root_ref), rtol=2e-2, atol=2e-2)
    assert np.allclose(np.asarray(g_ent_s), np.asarray(g_ent_ref), rtol=2e-2, atol=2e-2)
    assert np.allclose(np.asarray(g_root_s), np.asarray(g_root_ref), rtol=2e-2, atol=2e-2)
    assert g_ent.shape == (B, max(ent_len), NHID) and g_root.shape == (B, NHID)

    print("KERNEL_OK")
</pallas_src>

<mosaic_0001>
module attributes {stable_mosaic.version = 11 : i64} {
  func.func @gat_prop_kernel(%arg0: i32, %arg1: i32, %arg2: memref<64x32xf32, #tpu.memory_space<any>>, %arg3: memref<64x64xi8, #tpu.memory_space<vmem>>, %arg4: memref<1x32x32xbf16, #tpu.memory_space<vmem>>, %arg5: memref<1x32x64xbf16, #tpu.memory_space<vmem>>, %arg6: memref<1x32x128xbf16, #tpu.memory_space<vmem>>, %arg7: memref<1x128x32xbf16, #tpu.memory_space<vmem>>, %arg8: memref<1x8x128xf32, #tpu.memory_space<vmem>>, %arg9: memref<32x32xf32, #tpu.memory_space<vmem>>, %arg10: memref<64x32xf32, #tpu.memory_space<vmem>>, %arg11: memref<4x8x64xbf16, #tpu.memory_space<vmem>>, %arg12: memref<64x32xbf16, #tpu.memory_space<vmem>>) attributes {dimension_semantics = [#tpu.dimension_semantics<arbitrary>, #tpu.dimension_semantics<arbitrary>], iteration_bounds = array<i64: 2, 2>, scalar_prefetch = 0 : i64, scratch_operands = 3 : i64, tpu.core_type = #tpu.core_type<tc>, window_params = [{}, {pipeline_mode = #tpu.pipeline_mode<synchronous>, transform_indices = @transform_1, window_bounds = array<i64: 64, 64>}, {transform_indices = @transform_2, window_bounds = array<i64: 1, 32, 32>}, {transform_indices = @transform_3, window_bounds = array<i64: 1, 32, 64>}, {transform_indices = @transform_4, window_bounds = array<i64: 1, 32, 128>}, {transform_indices = @transform_5, window_bounds = array<i64: 1, 128, 32>}, {transform_indices = @transform_6, window_bounds = array<i64: 1, 8, 128>}, {transform_indices = @transform_7, window_bounds = array<i64: 32, 32>}]} {
    %c0_i32 = arith.constant 0 : i32
    %0 = arith.cmpi eq, %arg1, %c0_i32 : i32
    %1 = arith.extui %0 : i1 to i32
    %c0_i32_0 = arith.constant 0 : i32
    %2 = arith.cmpi ne, %1, %c0_i32_0 : i32
    scf.if %2 {
      %c0_i32_65 = arith.constant 0 : i32
      %175 = arith.cmpi eq, %arg0, %c0_i32_65 : i32
      %176 = arith.extui %175 : i1 to i32
      %c0_i32_66 = arith.constant 0 : i32
      %177 = arith.cmpi ne, %176, %c0_i32_66 : i32
      scf.if %177 {
        "tpu.region"() ({
          %208 = tpu.sem_alloc : memref<!tpu.dma_semaphore, #tpu.memory_space<semaphore_mem>>
          tpu.enqueue_dma source(%arg2 : memref<64x32xf32, #tpu.memory_space<any>>) target(%arg10 : memref<64x32xf32, #tpu.memory_space<vmem>>) target_semaphore(%208 : memref<!tpu.dma_semaphore, #tpu.memory_space<semaphore_mem>>)
          tpu.wait_dma2 semaphore(%208 : memref<!tpu.dma_semaphore, #tpu.memory_space<semaphore_mem>>) src(%arg2 : memref<64x32xf32, #tpu.memory_space<any>>) dst(%arg10 : memref<64x32xf32, #tpu.memory_space<vmem>>)
          tpu.yield
        }) : () -> ()
      } else {
      }
      %c0_67 = arith.constant 0 : index
      %c0_68 = arith.constant 0 : index
      %178 = vector.load %arg10[%c0_67, %c0_68] : memref<64x32xf32, #tpu.memory_space<vmem>>, vector<64x32xf32>
      %179 = arith.truncf %178 : vector<64x32xf32> to vector<64x32xbf16>
      %c0_69 = arith.constant 0 : index
      %c0_70 = arith.constant 0 : index
      %c0_71 = arith.constant 0 : index
      %180 = vector.load %arg5[%c0_69, %c0_70, %c0_71] : memref<1x32x64xbf16, #tpu.memory_space<vmem>>, vector<1x32x64xbf16>
      %181 = vector.shape_cast %180 : vector<1x32x64xbf16> to vector<32x64xbf16>
      %cst_72 = arith.constant dense<0.000000e+00> : vector<64x64xf32>
      %182 = tpu.matmul %179, %181, %cst_72 {dimension_numbers = #tpu.dot_dimension_numbers<[1], [0], [0], [1], [0, 0, 1, 1], [], []>} : vector<64x32xbf16>, vector<32x64xbf16>, vector<64x64xf32> -> vector<64x64xf32>
      %183 = vector.extract_strided_slice %182 {offsets = [0, 0], sizes = [64, 32], strides = [1, 1]} : vector<64x64xf32> to vector<64x32xf32>
      %184 = tpu.transpose %183, [1, 0] : vector<64x32xf32> -> vector<32x64xf32>
      %185 = vector.extract_strided_slice %184 {offsets = [0, 0], sizes = [8, 64], strides = [1, 1]} : vector<32x64xf32> to vector<8x64xf32>
      %186 = arith.truncf %185 : vector<8x64xf32> to vector<8x64xbf16>
      %c0_73 = arith.constant 0 : index
      %c0_74 = arith.constant 0 : index
      %c0_75 = arith.constant 0 : index
      %187 = vector.load %arg11[%c0_73, %c0_74, %c0_75] : memref<4x8x64xbf16, #tpu.memory_space<vmem>>, vector<1x8x64xbf16>
      %188 = vector.shape_cast %187 : vector<1x8x64xbf16> to vector<8x64xbf16>
      %189 = vector.shape_cast %186 : vector<8x64xbf16> to vector<1x8x64xbf16>
      tpu.vector_store %arg11[%c0_73, %c0_74, %c0_75], %189 {strides = array<i32>} : memref<4x8x64xbf16, #tpu.memory_space<vmem>>, vector<1x8x64xbf16>,
      %190 = vector.extract_strided_slice %184 {offsets = [8, 0], sizes = [8, 64], strides = [1, 1]} : vector<32x64xf32> to vector<8x64xf32>
      %191 = arith.truncf %190 : vector<8x64xf32> to vector<8x64xbf16>
      %c1_76 = arith.constant 1 : index
      %c0_77 = arith.constant 0 : index
      %c0_78 = arith.constant 0 : index
      %192 = vector.load %arg11[%c1_76, %c0_77, %c0_78] : memref<4x8x64xbf16, #tpu.memory_space<vmem>>, vector<1x8x64xbf16>
      %193 = vector.shape_cast %192 : vector<1x8x64xbf16> to vector<8x64xbf16>
      %194 = vector.shape_cast %191 : vector<8x64xbf16> to vector<1x8x64xbf16>
      tpu.vector_store %arg11[%c1_76, %c0_77, %c0_78], %194 {strides = array<i32>} : memref<4x8x64xbf16, #tpu.memory_space<vmem>>, vector<1x8x64xbf16>,
      %195 = vector.extract_strided_slice %184 {offsets = [16, 0], sizes = [8, 64], strides = [1, 1]} : vector<32x64xf32> to vector<8x64xf32>
      %196 = arith.truncf %195 : vector<8x64xf32> to vector<8x64xbf16>
      %c2_79 = arith.constant 2 : index
      %c0_80 = arith.constant 0 : index
      %c0_81 = arith.constant 0 : index
      %197 = vector.load %arg11[%c2_79, %c0_80, %c0_81] : memref<4x8x64xbf16, #tpu.memory_space<vmem>>, vector<1x8x64xbf16>
      %198 = vector.shape_cast %197 : vector<1x8x64xbf16> to vector<8x64xbf16>
      %199 = vector.shape_cast %196 : vector<8x64xbf16> to vector<1x8x64xbf16>
      tpu.vector_store %arg11[%c2_79, %c0_80, %c0_81], %199 {strides = array<i32>} : memref<4x8x64xbf16, #tpu.memory_space<vmem>>, vector<1x8x64xbf16>,
      %200 = vector.extract_strided_slice %184 {offsets = [24, 0], sizes = [8, 64], strides = [1, 1]} : vector<32x64xf32> to vector<8x64xf32>
      %201 = arith.truncf %200 : vector<8x64xf32> to vector<8x64xbf16>
      %c3_82 = arith.constant 3 : index
      %c0_83 = arith.constant 0 : index
      %c0_84 = arith.constant 0 : index
      %202 = vector.load %arg11[%c3_82, %c0_83, %c0_84] : memref<4x8x64xbf16, #tpu.memory_space<vmem>>, vector<1x8x64xbf16>
      %203 = vector.shape_cast %202 : vector<1x8x64xbf16> to vector<8x64xbf16>
      %204 = vector.shape_cast %201 : vector<8x64xbf16> to vector<1x8x64xbf16>
      tpu.vector_store %arg11[%c3_82, %c0_83, %c0_84], %204 {strides = array<i32>} : memref<4x8x64xbf16, #tpu.memory_space<vmem>>, vector<1x8x64xbf16>,
      %205 = vector.extract_strided_slice %182 {offsets = [0, 32], sizes = [64, 32], strides = [1, 1]} : vector<64x64xf32> to vector<64x32xf32>
      %206 = arith.truncf %205 : vector<64x32xf32> to vector<64x32xbf16>
      %c0_85 = arith.constant 0 : index
      %c0_86 = arith.constant 0 : index
      %207 = vector.load %arg12[%c0_85, %c0_86] : memref<64x32xbf16, #tpu.memory_space<vmem>>, vector<64x32xbf16>
      tpu.vector_store %arg12[%c0_85, %c0_86], %206 {strides = array<i32>} : memref<64x32xbf16, #tpu.memory_space<vmem>>, vector<64x32xbf16>,
    } else {
    }
    %c32_i32 = arith.constant 32 : i32
    %3 = arith.muli %arg1, %c32_i32 : i32
    %4 = tpu.assume_multiple %3, 32 : i32
    %5 = arith.index_cast %4 : i32 to index
    %c0 = arith.constant 0 : index
    %6 = vector.load %arg3[%5, %c0] : memref<64x64xi8, #tpu.memory_space<vmem>>, vector<32x64xi8>
    %7 = arith.sitofp %6 : vector<32x64xi8> to vector<32x64xf32>
    %cst = arith.constant 1.000000e+00 : f32
    %8 = vector.broadcast %cst : f32 to vector<32x64xf32>
    %9 = arith.subf %7, %8 : vector<32x64xf32>
    %cst_1 = arith.constant 1.000000e+30 : f32
    %10 = vector.broadcast %cst_1 : f32 to vector<32x64xf32>
    %11 = arith.mulf %9, %10 : vector<32x64xf32>
    %12 = arith.index_cast %4 : i32 to index
    %c0_2 = arith.constant 0 : index
    %13 = vector.load %arg10[%12, %c0_2] : memref<64x32xf32, #tpu.memory_space<vmem>>, vector<32x32xf32>
    %14 = arith.truncf %13 : vector<32x32xf32> to vector<32x32xbf16>
    %c0_3 = arith.constant 0 : index
    %c0_4 = arith.constant 0 : index
    %c0_5 = arith.constant 0 : index
    %15 = vector.load %arg4[%c0_3, %c0_4, %c0_5] : memref<1x32x32xbf16, #tpu.memory_space<vmem>>, vector<1x32x32xbf16>
    %16 = vector.shape_cast %15 : vector<1x32x32xbf16> to vector<32x32xbf16>
    %cst_6 = arith.constant dense<0.000000e+00> : vector<32x32xf32>
    %17 = tpu.matmul %14, %16, %cst_6 {dimension_numbers = #tpu.dot_dimension_numbers<[1], [0], [0], [1], [0, 0, 1, 1], [], []>} : vector<32x32xbf16>, vector<32x32xbf16>, vector<32x32xf32> -> vector<32x32xf32>
    %18 = arith.truncf %17 : vector<32x32xf32> to vector<32x32xbf16>
    %19 = vector.extract_strided_slice %18 {offsets = [0, 0], sizes = [32, 8], strides = [1, 1]} : vector<32x32xbf16> to vector<32x8xbf16>
    %c0_7 = arith.constant 0 : index
    %c0_8 = arith.constant 0 : index
    %c0_9 = arith.constant 0 : index
    %20 = vector.load %arg11[%c0_7, %c0_8, %c0_9] : memref<4x8x64xbf16, #tpu.memory_space<vmem>>, vector<1x8x64xbf16>
    %21 = vector.shape_cast %20 : vector<1x8x64xbf16> to vector<8x64xbf16>
    %cst_10 = arith.constant dense<0.000000e+00> : vector<32x64xf32>
    %22 = tpu.matmul %19, %21, %cst_10 {dimension_numbers = #tpu.dot_dimension_numbers<[1], [0], [0], [1], [0, 0, 1, 1], [], []>} : vector<32x8xbf16>, vector<8x64xbf16>, vector<32x64xf32> -> vector<32x64xf32>
    %23 = arith.addf %22, %11 : vector<32x64xf32>
    %cst_11 = arith.constant dense<0xFF800000> : vector<32xf32>
    %24 = vector.multi_reduction <maximumf>, %23, %cst_11 [1] : vector<32x64xf32> to vector<32xf32>
    %25 = vector.shape_cast %24 : vector<32xf32> to vector<32x1xf32>
    %26 = vector.broadcast %25 : vector<32x1xf32> to vector<32x64xf32>
    %27 = arith.subf %23, %26 : vector<32x64xf32>
    %28 = math.exp %27 : vector<32x64xf32>
    %cst_12 = arith.constant dense<0.000000e+00> : vector<32xf32>
    %29 = vector.multi_reduction <add>, %28, %cst_12 [1] : vector<32x64xf32> to vector<32xf32>
    %30 = vector.shape_cast %29 : vector<32xf32> to vector<32x1xf32>
    %cst_13 = arith.constant 9.99999968E-21 : f32
    %31 = vector.broadcast %cst_13 : f32 to vector<32x1xf32>
    %32 = arith.maximumf %30, %31 : vector<32x1xf32>
    %33 = tpu.reciprocal %32 {approx = true} : vector<32x1xf32> -> vector<32x1xf32>
    %34 = arith.truncf %28 : vector<32x64xf32> to vector<32x64xbf16>
    %c0_14 = arith.constant 0 : index
    %c0_15 = arith.constant 0 : index
    %35 = vector.load %arg12[%c0_14, %c0_15] : memref<64x32xbf16, #tpu.memory_space<vmem>>, vector<64x8xbf16>
    %cst_16 = arith.constant dense<0.000000e+00> : vector<32x8xf32>
    %36 = tpu.matmul %34, %35, %cst_16 {dimension_numbers = #tpu.dot_dimension_numbers<[1], [0], [0], [1], [0, 0, 1, 1], [], []>} : vector<32x64xbf16>, vector<64x8xbf16>, vector<32x8xf32> -> vector<32x8xf32>
    %37 = vector.broadcast %33 : vector<32x1xf32> to vector<32x8xf32>
    %38 = arith.mulf %36, %37 : vector<32x8xf32>
    %39 = vector.extract_strided_slice %18 {offsets = [0, 8], sizes = [32, 8], strides = [1, 1]} : vector<32x32xbf16> to vector<32x8xbf16>
    %c1 = arith.constant 1 : index
    %c0_17 = arith.constant 0 : index
    %c0_18 = arith.constant 0 : index
    %40 = vector.load %arg11[%c1, %c0_17, %c0_18] : memref<4x8x64xbf16, #tpu.memory_space<vmem>>, vector<1x8x64xbf16>
    %41 = vector.shape_cast %40 : vector<1x8x64xbf16> to vector<8x64xbf16>
    %cst_19 = arith.constant dense<0.000000e+00> : vector<32x64xf32>
    %42 = tpu.matmul %39, %41, %cst_19 {dimension_numbers = #tpu.dot_dimension_numbers<[1], [0], [0], [1], [0, 0, 1, 1], [], []>} : vector<32x8xbf16>, vector<8x64xbf16>, vector<32x64xf32> -> vector<32x64xf32>
    %43 = arith.addf %42, %11 : vector<32x64xf32>
    %cst_20 = arith.constant dense<0xFF800000> : vector<32xf32>
    %44 = vector.multi_reduction <maximumf>, %43, %cst_20 [1] : vector<32x64xf32> to vector<32xf32>
    %45 = vector.shape_cast %44 : vector<32xf32> to vector<32x1xf32>
    %46 = vector.broadcast %45 : vector<32x1xf32> to vector<32x64xf32>
    %47 = arith.subf %43, %46 : vector<32x64xf32>
    %48 = math.exp %47 : vector<32x64xf32>
    %cst_21 = arith.constant dense<0.000000e+00> : vector<32xf32>
    %49 = vector.multi_reduction <add>, %48, %cst_21 [1] : vector<32x64xf32> to vector<32xf32>
    %50 = vector.shape_cast %49 : vector<32xf32> to vector<32x1xf32>
    %cst_22 = arith.constant 9.99999968E-21 : f32
    %51 = vector.broadcast %cst_22 : f32 to vector<32x1xf32>
    %52 = arith.maximumf %50, %51 : vector<32x1xf32>
    %53 = tpu.reciprocal %52 {approx = true} : vector<32x1xf32> -> vector<32x1xf32>
    %54 = arith.truncf %48 : vector<32x64xf32> to vector<32x64xbf16>
    %c0_23 = arith.constant 0 : index
    %c8 = arith.constant 8 : index
    %55 = vector.load %arg12[%c0_23, %c8] : memref<64x32xbf16, #tpu.memory_space<vmem>>, vector<64x8xbf16>
    %cst_24 = arith.constant dense<0.000000e+00> : vector<32x8xf32>
    %56 = tpu.matmul %54, %55, %cst_24 {dimension_numbers = #tpu.dot_dimension_numbers<[1], [0], [0], [1], [0, 0, 1, 1], [], []>} : vector<32x64xbf16>, vector<64x8xbf16>, vector<32x8xf32> -> vector<32x8xf32>
    %57 = vector.broadcast %53 : vector<32x1xf32> to vector<32x8xf32>
    %58 = arith.mulf %56, %57 : vector<32x8xf32>
    %59 = vector.extract_strided_slice %18 {offsets = [0, 16], sizes = [32, 8], strides = [1, 1]} : vector<32x32xbf16> to vector<32x8xbf16>
    %c2 = arith.constant 2 : index
    %c0_25 = arith.constant 0 : index
    %c0_26 = arith.constant 0 : index
    %60 = vector.load %arg11[%c2, %c0_25, %c0_26] : memref<4x8x64xbf16, #tpu.memory_space<vmem>>, vector<1x8x64xbf16>
    %61 = vector.shape_cast %60 : vector<1x8x64xbf16> to vector<8x64xbf16>
    %cst_27 = arith.constant dense<0.000000e+00> : vector<32x64xf32>
    %62 = tpu.matmul %59, %61, %cst_27 {dimension_numbers = #tpu.dot_dimension_numbers<[1], [0], [0], [1], [0, 0, 1, 1], [], []>} : vector<32x8xbf16>, vector<8x64xbf16>, vector<32x64xf32> -> vector<32x64xf32>
    %63 = arith.addf %62, %11 : vector<32x64xf32>
    %cst_28 = arith.constant dense<0xFF800000> : vector<32xf32>
    %64 = vector.multi_reduction <maximumf>, %63, %cst_28 [1] : vector<32x64xf32> to vector<32xf32>
    %65 = vector.shape_cast %64 : vector<32xf32> to vector<32x1xf32>
    %66 = vector.broadcast %65 : vector<32x1xf32> to vector<32x64xf32>
    %67 = arith.subf %63, %66 : vector<32x64xf32>
    %68 = math.exp %67 : vector<32x64xf32>
    %cst_29 = arith.constant dense<0.000000e+00> : vector<32xf32>
    %69 = vector.multi_reduction <add>, %68, %cst_29 [1] : vector<32x64xf32> to vector<32xf32>
    %70 = vector.shape_cast %69 : vector<32xf32> to vector<32x1xf32>
    %cst_30 = arith.constant 9.99999968E-21 : f32
    %71 = vector.broadcast %cst_30 : f32 to vector<32x1xf32>
    %72 = arith.maximumf %70, %71 : vector<32x1xf32>
    %73 = tpu.reciprocal %72 {approx = true} : vector<32x1xf32> -> vector<32x1xf32>
    %74 = arith.truncf %68 : vector<32x64xf32> to vector<32x64xbf16>
    %c0_31 = arith.constant 0 : index
    %c16 = arith.constant 16 : index
    %75 = vector.load %arg12[%c0_31, %c16] : memref<64x32xbf16, #tpu.memory_space<vmem>>, vector<64x8xbf16>
    %cst_32 = arith.constant dense<0.000000e+00> : vector<32x8xf32>
    %76 = tpu.matmul %74, %75, %cst_32 {dimension_numbers = #tpu.dot_dimension_numbers<[1], [0], [0], [1], [0, 0, 1, 1], [], []>} : vector<32x64xbf16>, vector<64x8xbf16>, vector<32x8xf32> -> vector<32x8xf32>
    %77 = vector.broadcast %73 : vector<32x1xf32> to vector<32x8xf32>
    %78 = arith.mulf %76, %77 : vector<32x8xf32>
    %79 = vector.extract_strided_slice %18 {offsets = [0, 24], sizes = [32, 8], strides = [1, 1]} : vector<32x32xbf16> to vector<32x8xbf16>
    %c3 = arith.constant 3 : index
    %c0_33 = arith.constant 0 : index
    %c0_34 = arith.constant 0 : index
    %80 = vector.load %arg11[%c3, %c0_33, %c0_34] : memref<4x8x64xbf16, #tpu.memory_space<vmem>>, vector<1x8x64xbf16>
    %81 = vector.shape_cast %80 : vector<1x8x64xbf16> to vector<8x64xbf16>
    %cst_35 = arith.constant dense<0.000000e+00> : vector<32x64xf32>
    %82 = tpu.matmul %79, %81, %cst_35 {dimension_numbers = #tpu.dot_dimension_numbers<[1], [0], [0], [1], [0, 0, 1, 1], [], []>} : vector<32x8xbf16>, vector<8x64xbf16>, vector<32x64xf32> -> vector<32x64xf32>
    %83 = arith.addf %82, %11 : vector<32x64xf32>
    %cst_36 = arith.constant dense<0xFF800000> : vector<32xf32>
    %84 = vector.multi_reduction <maximumf>, %83, %cst_36 [1] : vector<32x64xf32> to vector<32xf32>
    %85 = vector.shape_cast %84 : vector<32xf32> to vector<32x1xf32>
    %86 = vector.broadcast %85 : vector<32x1xf32> to vector<32x64xf32>
    %87 = arith.subf %83, %86 : vector<32x64xf32>
    %88 = math.exp %87 : vector<32x64xf32>
    %cst_37 = arith.constant dense<0.000000e+00> : vector<32xf32>
    %89 = vector.multi_reduction <add>, %88, %cst_37 [1] : vector<32x64xf32> to vector<32xf32>
    %90 = vector.shape_cast %89 : vector<32xf32> to vector<32x1xf32>
    %cst_38 = arith.constant 9.99999968E-21 : f32
    %91 = vector.broadcast %cst_38 : f32 to vector<32x1xf32>
    %92 = arith.maximumf %90, %91 : vector<32x1xf32>
    %93 = tpu.reciprocal %92 {approx = true} : vector<32x1xf32> -> vector<32x1xf32>
    %94 = arith.truncf %88 : vector<32x64xf32> to vector<32x64xbf16>
    %c0_39 = arith.constant 0 : index
    %c24 = arith.constant 24 : index
    %95 = vector.load %arg12[%c0_39, %c24] : memref<64x32xbf16, #tpu.memory_space<vmem>>, vector<64x8xbf16>
    %cst_40 = arith.constant dense<0.000000e+00> : vector<32x8xf32>
    %96 = tpu.matmul %94, %95, %cst_40 {dimension_numbers = #tpu.dot_dimension_numbers<[1], [0], [0], [1], [0, 0, 1, 1], [], []>} : vector<32x64xbf16>, vector<64x8xbf16>, vector<32x8xf32> -> vector<32x8xf32>
    %97 = vector.broadcast %93 : vector<32x1xf32> to vector<32x8xf32>
    %98 = arith.mulf %96, %97 : vector<32x8xf32>
    %99 = tpu.concatenate %38, %58, %78, %98 in 1 : vector<32x8xf32>, vector<32x8xf32>, vector<32x8xf32>, vector<32x8xf32> -> vector<32x32xf32>
    %c0_41 = arith.constant 0 : index
    %c0_42 = arith.constant 0 : index
    %c0_43 = arith.constant 0 : index
    %100 = vector.load %arg8[%c0_41, %c0_42, %c0_43] : memref<1x8x128xf32, #tpu.memory_space<vmem>>, vector<1x8x128xf32>
    %101 = vector.shape_cast %100 : vector<1x8x128xf32> to vector<8x128xf32>
    %102 = vector.extract_strided_slice %101 {offsets = [0, 0], sizes = [1, 128], strides = [1, 1]} : vector<8x128xf32> to vector<1x128xf32>
    %103 = vector.extract_strided_slice %101 {offsets = [1, 0], sizes = [1, 128], strides = [1, 1]} : vector<8x128xf32> to vector<1x128xf32>
    %104 = vector.extract_strided_slice %101 {offsets = [2, 0], sizes = [1, 32], strides = [1, 1]} : vector<8x128xf32> to vector<1x32xf32>
    %105 = vector.extract_strided_slice %101 {offsets = [3, 0], sizes = [1, 32], strides = [1, 1]} : vector<8x128xf32> to vector<1x32xf32>
    %106 = vector.extract_strided_slice %101 {offsets = [4, 0], sizes = [1, 32], strides = [1, 1]} : vector<8x128xf32> to vector<1x32xf32>
    %107 = arith.addf %99, %13 : vector<32x32xf32>
    %cst_44 = arith.constant dense<0.000000e+00> : vector<32xf32>
    %108 = vector.multi_reduction <add>, %107, %cst_44 [1] : vector<32x32xf32> to vector<32xf32>
    %109 = vector.shape_cast %108 : vector<32xf32> to vector<32x1xf32>
    %cst_45 = arith.constant 3.200000e+01 : f32
    %110 = vector.broadcast %cst_45 : f32 to vector<32x1xf32>
    %111 = arith.divf %109, %110 : vector<32x1xf32>
    %112 = vector.broadcast %111 : vector<32x1xf32> to vector<32x32xf32>
    %113 = arith.subf %107, %112 : vector<32x32xf32>
    %114 = arith.mulf %113, %113 : vector<32x32xf32>
    %cst_46 = arith.constant dense<0.000000e+00> : vector<32xf32>
    %115 = vector.multi_reduction <add>, %114, %cst_46 [1] : vector<32x32xf32> to vector<32xf32>
    %116 = vector.shape_cast %115 : vector<32xf32> to vector<32x1xf32>
    %cst_47 = arith.constant 3.200000e+01 : f32
    %117 = vector.broadcast %cst_47 : f32 to vector<32x1xf32>
    %118 = arith.divf %116, %117 : vector<32x1xf32>
    %119 = vector.broadcast %111 : vector<32x1xf32> to vector<32x32xf32>
    %120 = arith.subf %107, %119 : vector<32x32xf32>
    %cst_48 = arith.constant 9.99999974E-6 : f32
    %121 = vector.broadcast %cst_48 : f32 to vector<32x1xf32>
    %122 = arith.addf %118, %121 : vector<32x1xf32>
    %123 = math.rsqrt %122 : vector<32x1xf32>
    %124 = vector.broadcast %123 : vector<32x1xf32> to vector<32x32xf32>
    %125 = arith.mulf %120, %124 : vector<32x32xf32>
    %126 = vector.broadcast %105 : vector<1x32xf32> to vector<32x32xf32>
    %127 = arith.mulf %125, %126 : vector<32x32xf32>
    %128 = vector.broadcast %106 : vector<1x32xf32> to vector<32x32xf32>
    %129 = arith.addf %127, %128 : vector<32x32xf32>
    %130 = arith.truncf %129 : vector<32x32xf32> to vector<32x32xbf16>
    %c0_49 = arith.constant 0 : index
    %c0_50 = arith.constant 0 : index
    %c0_51 = arith.constant 0 : index
    %131 = vector.load %arg6[%c0_49, %c0_50, %c0_51] : memref<1x32x128xbf16, #tpu.memory_space<vmem>>, vector<1x32x128xbf16>
    %132 = vector.shape_cast %131 : vector<1x32x128xbf16> to vector<32x128xbf16>
    %cst_52 = arith.constant dense<0.000000e+00> : vector<32x128xf32>
    %133 = tpu.matmul %130, %132, %cst_52 {dimension_numbers = #tpu.dot_dimension_numbers<[1], [0], [0], [1], [0, 0, 1, 1], [], []>} : vector<32x32xbf16>, vector<32x128xbf16>, vector<32x128xf32> -> vector<32x128xf32>
    %134 = vector.broadcast %102 : vector<1x128xf32> to vector<32x128xf32>
    %135 = arith.addf %133, %134 : vector<32x128xf32>
    %cst_53 = arith.constant 0.000000e+00 : f32
    %136 = vector.broadcast %cst_53 : f32 to vector<32x128xf32>
    %137 = arith.cmpf oge, %135, %136 : vector<32x128xf32>
    %138 = vector.broadcast %103 : vector<1x128xf32> to vector<32x128xf32>
    %139 = arith.mulf %138, %135 : vector<32x128xf32>
    %140 = arith.select %137, %135, %139 : vector<32x128xi1>, vector<32x128xf32>
    %141 = arith.truncf %140 : vector<32x128xf32> to vector<32x128xbf16>
    %c0_54 = arith.constant 0 : index
    %c0_55 = arith.constant 0 : index
    %c0_56 = arith.constant 0 : index
    %142 = vector.load %arg7[%c0_54, %c0_55, %c0_56] : memref<1x128x32xbf16, #tpu.memory_space<vmem>>, vector<1x128x32xbf16>
    %143 = vector.shape_cast %142 : vector<1x128x32xbf16> to vector<128x32xbf16>
    %cst_57 = arith.constant dense<0.000000e+00> : vector<32x32xf32>
    %144 = tpu.matmul %141, %143, %cst_57 {dimension_numbers = #tpu.dot_dimension_numbers<[1], [0], [0], [1], [0, 0, 1, 1], [], []>} : vector<32x128xbf16>, vector<128x32xbf16>, vector<32x32xf32> -> vector<32x32xf32>
    %145 = vector.broadcast %104 : vector<1x32xf32> to vector<32x32xf32>
    %146 = arith.addf %144, %145 : vector<32x32xf32>
    %147 = arith.addf %129, %146 : vector<32x32xf32>
    %cst_58 = arith.constant dense<0.000000e+00> : vector<32xf32>
    %148 = vector.multi_reduction <add>, %147, %cst_58 [1] : vector<32x32xf32> to vector<32xf32>
    %149 = vector.shape_cast %148 : vector<32xf32> to vector<32x1xf32>
    %cst_59 = arith.constant 3.200000e+01 : f32
    %150 = vector.broadcast %cst_59 : f32 to vector<32x1xf32>
    %151 = arith.divf %149, %150 : vector<32x1xf32>
    %152 = vector.broadcast %151 : vector<32x1xf32> to vector<32x32xf32>
    %153 = arith.subf %147, %152 : vector<32x32xf32>
    %154 = arith.mulf %153, %153 : vector<32x32xf32>
    %cst_60 = arith.constant dense<0.000000e+00> : vector<32xf32>
    %155 = vector.multi_reduction <add>, %154, %cst_60 [1] : vector<32x32xf32> to vector<32xf32>
    %156 = vector.shape_cast %155 : vector<32xf32> to vector<32x1xf32>
    %cst_61 = arith.constant 3.200000e+01 : f32
    %157 = vector.broadcast %cst_61 : f32 to vector<32x1xf32>
    %158 = arith.divf %156, %157 : vector<32x1xf32>
    %159 = vector.broadcast %151 : vector<32x1xf32> to vector<32x32xf32>
    %160 = arith.subf %147, %159 : vector<32x32xf32>
    %cst_62 = arith.constant 9.99999974E-6 : f32
    %161 = vector.broadcast %cst_62 : f32 to vector<32x1xf32>
    %162 = arith.addf %158, %161 : vector<32x1xf32>
    %163 = math.rsqrt %162 : vector<32x1xf32>
    %164 = vector.broadcast %163 : vector<32x1xf32> to vector<32x32xf32>
    %165 = arith.mulf %160, %164 : vector<32x32xf32>
    %166 = vector.broadcast %105 : vector<1x32xf32> to vector<32x32xf32>
    %167 = arith.mulf %165, %166 : vector<32x32xf32>
    %168 = vector.broadcast %106 : vector<1x32xf32> to vector<32x32xf32>
    %169 = arith.addf %167, %168 : vector<32x32xf32>
    %170 = arith.index_cast %4 : i32 to index
    %c0_63 = arith.constant 0 : index
    %171 = vector.load %arg10[%170, %c0_63] : memref<64x32xf32, #tpu.memory_space<vmem>>, vector<32x32xf32>
    tpu.vector_store %arg10[%170, %c0_63], %169 {strides = array<i32>} : memref<64x32xf32, #tpu.memory_space<vmem>>, vector<32x32xf32>,
    %c1_i32 = arith.constant 1 : i32
    %172 = arith.cmpi eq, %arg0, %c1_i32 : i32
    %173 = arith.extui %172 : i1 to i32
    %c0_i32_64 = arith.constant 0 : i32
    %174 = arith.cmpi ne, %173, %c0_i32_64 : i32
    scf.if %174 {
      %c0_65 = arith.constant 0 : index
      %c0_66 = arith.constant 0 : index
      %175 = vector.load %arg9[%c0_65, %c0_66] : memref<32x32xf32, #tpu.memory_space<vmem>>, vector<32x32xf32>
      tpu.vector_store %arg9[%c0_65, %c0_66], %169 {strides = array<i32>} : memref<32x32xf32, #tpu.memory_space<vmem>>, vector<32x32xf32>,
    } else {
    }
    return
  }
  func.func @transform_1(%arg0: i32, %arg1: i32) -> (i32, i32) {
    %c0_i32 = arith.constant 0 : i32
    %c0_i32_0 = arith.constant 0 : i32
    %c0_i32_1 = arith.constant 0 : i32
    return %c0_i32, %c0_i32_0 : i32, i32
  }
  func.func @transform_2(%arg0: i32, %arg1: i32) -> (i32, i32, i32) {
    %c0_i32 = arith.constant 0 : i32
    %c0_i32_0 = arith.constant 0 : i32
    %c0_i32_1 = arith.constant 0 : i32
    return %arg0, %c0_i32, %c0_i32_0 : i32, i32, i32
  }
  func.func @transform_3(%arg0: i32, %arg1: i32) -> (i32, i32, i32) {
    %c0_i32 = arith.constant 0 : i32
    %c0_i32_0 = arith.constant 0 : i32
    %c0_i32_1 = arith.constant 0 : i32
    return %arg0, %c0_i32, %c0_i32_0 : i32, i32, i32
  }
  func.func @transform_4(%arg0: i32, %arg1: i32) -> (i32, i32, i32) {
    %c0_i32 = arith.constant 0 : i32
    %c0_i32_0 = arith.constant 0 : i32
    %c0_i32_1 = arith.constant 0 : i32
    return %arg0, %c0_i32, %c0_i32_0 : i32, i32, i32
  }
  func.func @transform_5(%arg0: i32, %arg1: i32) -> (i32, i32, i32) {
    %c0_i32 = arith.constant 0 : i32
    %c0_i32_0 = arith.constant 0 : i32
    %c0_i32_1 = arith.constant 0 : i32
    return %arg0, %c0_i32, %c0_i32_0 : i32, i32, i32
  }
  func.func @transform_6(%arg0: i32, %arg1: i32) -> (i32, i32, i32) {
    %c0_i32 = arith.constant 0 : i32
    %c0_i32_0 = arith.constant 0 : i32
    %c0_i32_1 = arith.constant 0 : i32
    return %arg0, %c0_i32, %c0_i32_0 : i32, i32, i32
  }
  func.func @transform_7(%arg0: i32, %arg1: i32) -> (i32, i32) {
    %c0_i32 = arith.constant 0 : i32
    %c0_i32_0 = arith.constant 0 : i32
    return %arg1, %c0_i32 : i32, i32
  }
}

</mosaic_0001>

<llo_original>
// kernel: tpu_custom_call.1
$region0: #{tpu_custom_call.1}
  #allocation0 [shape = 'u32[]', space=smem, size = 0x4, offset = 0x4, fixed_abs, tag = 'smem constant byte address 0x4 - core index']
  #allocation1 [shape = 'u32[72,128]{1,0:T(1,128)}', space=vmem, size = 0x9000, scoped, tag = 'internal scratch']
  #allocation2 [shape = 'f32[64,32]{1,0:T(8,128)}', space=vmem, size = 0x8000, scoped, tag = 'scratch operand']
  #allocation3 [shape = 'bf16[4,8,64]{2,1,0:T(8,128)(2,1)}', space=vmem, size = 0x2000, scoped, tag = 'scratch operand']
  #allocation4 [shape = 'bf16[64,32]{1,0:T(8,128)(2,1)}', space=vmem, size = 0x4000, scoped, tag = 'scratch operand']
  #allocation6 [shape = 's32[]', space=sflag, size = 0x4, offset = 0, fixed_abs, tag = 'sflag constant byte address 0x0 - dummy sync flag']
  %s0 = inlined_call_operand.vmem [shape: f32[64,32], index: 0, kind: input, shape index: {}]
  %s1 = inlined_call_operand.vmem [shape: s8[64,64], index: 1, kind: input, shape index: {}]
  %s2 = inlined_call_operand.vmem [shape: bf16[2,32,32], index: 2, kind: input, shape index: {}]
  %s3 = inlined_call_operand.vmem [shape: bf16[2,32,64], index: 3, kind: input, shape index: {}]
  %s4 = inlined_call_operand.vmem [shape: bf16[2,32,128], index: 4, kind: input, shape index: {}]
  %s5 = inlined_call_operand.vmem [shape: bf16[2,128,32], index: 5, kind: input, shape index: {}]
  %s6 = inlined_call_operand.vmem [shape: f32[2,8,128], index: 6, kind: input, shape index: {}]
  %s7 = inlined_call_operand.vmem [shape: f32[64,32], index: 7, kind: output, shape index: {}]
  %s8 = sld [smem:[#allocation0]]
  $region89: #{tpu_custom_call.1} parent=0
    _
  %s10 = ssub.s32 1, %s8
  %s11 = scalar_select 0, %s10, %s8
  loop: start=0, step=1, limit=6
  $region2: #{tpu_custom_call.1} parent=0 // loop_pre_header
    _
  $region3: #{tpu_custom_call.1} parent=0 // loop_header
    %s13 = sphi 0, %s17
    %p14 = scmp.ge.s32.totalorder %s13, 6
    %s20 = sphi 0, %s32
    %s21 = sphi 0, %s28
    %s22 = sphi 0, %s20
    %s23 = sphi 0, %s21
    %s24 = sphi 0, %s22
    %s25 = sphi 0, %s23
    %s33 = sphi 0, %s33
    %s35 = sphi 0, %s33
    %s36 = sphi 0, %s35
    %s50 = sphi 0, %s36
    %s56 = sphi 0, %s58
    %s59 = sphi 0, %s56
    %s60 = sphi 0, %s59
    %s76 = sphi 0, %s60
    %s82 = sphi 0, %s84
    %s85 = sphi 0, %s82
    %s86 = sphi 0, %s85
    %s102 = sphi 0, %s86
    %s108 = sphi 0, %s110
    %s111 = sphi 0, %s108
    %s112 = sphi 0, %s111
    %s128 = sphi 0, %s112
    %s134 = sphi 0, %s136
    %s137 = sphi 0, %s134
    %s138 = sphi 0, %s137
    %s154 = sphi 0, %s138
    %s160 = sphi 0, %s162
    %s163 = sphi 0, %s160
    %s164 = sphi 0, %s163
    %s180 = sphi 0, %s164
    %s186 = sphi 0, %s188
    %s189 = sphi 0, %s186
    %s190 = sphi 0, %s189
    %s206 = sphi 0, %s190
  $region4: #{tpu_custom_call.1} parent=0 // loop_header_branch
    %16 = sbr.rel (%p14) target = $region8
  $region5: #{tpu_custom_call.1} parent=0 // loop_body
    %s18 = ssub.s32 %s13, 1
    %s19 = ssub.s32 %s13, 2
    %s26 = sadd.s32 1, %s21
    %p27 = scmp.ge.s32.totalorder %s26, 2
    %s28 = scalar_select %p27, 0, %s26
    %s29 = sadd.s32 1, %s20
    %s30 = scalar_select %p27, %s29, %s20
    %p31 = scmp.ge.s32.totalorder %s30, 2
    %s32 = scalar_select %p31, 0, %s30
    %s34 = sadd.s32 %s33, 1
    %p37 = scmp.eq.s32.totalorder %s13, 3
    %p38 = scmp.ne.s32.totalorder %s33, %s35
    %p39 = scmp.eq.s32.totalorder %s13, 0
    %p40 = por %p38, %p39
    %p41 = scmp.ne.s32.totalorder %s33, %s35
    %p42 = scmp.eq.s32.totalorder %s18, 3
    %p43 = por %p41, %p42
    %p44 = scmp.ne.s32.totalorder %s35, %s36
    %p45 = scmp.eq.s32.totalorder %s18, 0
    %p46 = por %p44, %p45
    %p47 = scmp.ne.s32.totalorder %s35, %s36
    %p48 = scmp.eq.s32.totalorder %s19, 3
    %p49 = por %p47, %p48
    %p51 = scmp.ne.s32.totalorder %s36, %s50
    %p52 = scmp.eq.s32.totalorder %s19, 0
    %p53 = por %p51, %p52
    %s54 = ssub.s32 %s20, %s32
    %p55 = scmp.eq.s32.totalorder %s54, 0
    %s57 = sadd.s32 %s56, 1
    %s58 = scalar_select %p55, %s56, %s57
    %p61 = pneg %p55
    %p62 = scmp.eq.s32.totalorder %s13, 3
    %p63 = por %p61, %p62
    %p64 = scmp.ne.s32.totalorder %s56, %s59
    %p65 = scmp.eq.s32.totalorder %s13, 0
    %p66 = por %p64, %p65
    %p67 = scmp.ne.s32.totalorder %s56, %s59
    %p68 = scmp.eq.s32.totalorder %s18, 3
    %p69 = por %p67, %p68
    %p70 = scmp.ne.s32.totalorder %s59, %s60
    %p71 = scmp.eq.s32.totalorder %s18, 0
    %p72 = por %p70, %p71
    %p73 = scmp.ne.s32.totalorder %s59, %s60
    %p74 = scmp.eq.s32.totalorder %s19, 3
    %p75 = por %p73, %p74
    %p77 = scmp.ne.s32.totalorder %s60, %s76
    %p78 = scmp.eq.s32.totalorder %s19, 0
    %p79 = por %p77, %p78
    %s80 = ssub.s32 %s20, %s32
    %p81 = scmp.eq.s32.totalorder %s80, 0
    %s83 = sadd.s32 %s82, 1
    %s84 = scalar_select %p81, %s82, %s83
    %p87 = pneg %p81
    %p88 = scmp.eq.s32.totalorder %s13, 3
    %p89 = por %p87, %p88
    %p90 = scmp.ne.s32.totalorder %s82, %s85
    %p91 = scmp.eq.s32.totalorder %s13, 0
    %p92 = por %p90, %p91
    %p93 = scmp.ne.s32.totalorder %s82, %s85
    %p94 = scmp.eq.s32.totalorder %s18, 3
    %p95 = por %p93, %p94
    %p96 = scmp.ne.s32.totalorder %s85, %s86
    %p97 = scmp.eq.s32.totalorder %s18, 0
    %p98 = por %p96, %p97
    %p99 = scmp.ne.s32.totalorder %s85, %s86
    %p100 = scmp.eq.s32.totalorder %s19, 3
    %p101 = por %p99, %p100
    %p103 = scmp.ne.s32.totalorder %s86, %s102
    %p104 = scmp.eq.s32.totalorder %s19, 0
    %p105 = por %p103, %p104
    %s106 = ssub.s32 %s20, %s32
    %p107 = scmp.eq.s32.totalorder %s106, 0
    %s109 = sadd.s32 %s108, 1
    %s110 = scalar_select %p107, %s108, %s109
    %p113 = pneg %p107
    %p114 = scmp.eq.s32.totalorder %s13, 3
    %p115 = por %p113, %p114
    %p116 = scmp.ne.s32.totalorder %s108, %s111
    %p117 = scmp.eq.s32.totalorder %s13, 0
    %p118 = por %p116, %p117
    %p119 = scmp.ne.s32.totalorder %s108, %s111
    %p120 = scmp.eq.s32.totalorder %s18, 3
    %p121 = por %p119, %p120
    %p122 = scmp.ne.s32.totalorder %s111, %s112
    %p123 = scmp.eq.s32.totalorder %s18, 0
    %p124 = por %p122, %p123
    %p125 = scmp.ne.s32.totalorder %s111, %s112
    %p126 = scmp.eq.s32.totalorder %s19, 3
    %p127 = por %p125, %p126
    %p129 = scmp.ne.s32.totalorder %s112, %s128
    %p130 = scmp.eq.s32.totalorder %s19, 0
    %p131 = por %p129, %p130
    %s132 = ssub.s32 %s20, %s32
    %p133 = scmp.eq.s32.totalorder %s132, 0
    %s135 = sadd.s32 %s134, 1
    %s136 = scalar_select %p133, %s134, %s135
    %p139 = pneg %p133
    %p140 = scmp.eq.s32.totalorder %s13, 3
    %p141 = por %p139, %p140
    %p142 = scmp.ne.s32.totalorder %s134, %s137
    %p143 = scmp.eq.s32.totalorder %s13, 0
    %p144 = por %p142, %p143
    %p145 = scmp.ne.s32.totalorder %s134, %s137
    %p146 = scmp.eq.s32.totalorder %s18, 3
    %p147 = por %p145, %p146
    %p148 = scmp.ne.s32.totalorder %s137, %s138
    %p149 = scmp.eq.s32.totalorder %s18, 0
    %p150 = por %p148, %p149
    %p151 = scmp.ne.s32.totalorder %s137, %s138
    %p152 = scmp.eq.s32.totalorder %s19, 3
    %p153 = por %p151, %p152
    %p155 = scmp.ne.s32.totalorder %s138, %s154
    %p156 = scmp.eq.s32.totalorder %s19, 0
    %p157 = por %p155, %p156
    %s158 = ssub.s32 %s20, %s32
    %p159 = scmp.eq.s32.totalorder %s158, 0
    %s161 = sadd.s32 %s160, 1
    %s162 = scalar_select %p159, %s160, %s161
    %p165 = pneg %p159
    %p166 = scmp.eq.s32.totalorder %s13, 3
    %p167 = por %p165, %p166
    %p168 = scmp.ne.s32.totalorder %s160, %s163
    %p169 = scmp.eq.s32.totalorder %s13, 0
    %p170 = por %p168, %p169
    %p171 = scmp.ne.s32.totalorder %s160, %s163
    %p172 = scmp.eq.s32.totalorder %s18, 3
    %p173 = por %p171, %p172
    %p174 = scmp.ne.s32.totalorder %s163, %s164
    %p175 = scmp.eq.s32.totalorder %s18, 0
    %p176 = por %p174, %p175
    %p177 = scmp.ne.s32.totalorder %s163, %s164
    %p178 = scmp.eq.s32.totalorder %s19, 3
    %p179 = por %p177, %p178
    %p181 = scmp.ne.s32.totalorder %s164, %s180
    %p182 = scmp.eq.s32.totalorder %s19, 0
    %p183 = por %p181, %p182
    %s184 = ssub.s32 %s21, %s28
    %p185 = scmp.eq.s32.totalorder %s184, 0
    %s187 = sadd.s32 %s186, 1
    %s188 = scalar_select %p185, %s186, %s187
    %p191 = pneg %p185
    %p192 = scmp.eq.s32.totalorder %s13, 3
    %p193 = por %p191, %p192
    %p194 = scmp.ne.s32.totalorder %s186, %s189
    %p195 = scmp.eq.s32.totalorder %s13, 0
    %p196 = por %p194, %p195
    %p197 = scmp.ne.s32.totalorder %s186, %s189
    %p198 = scmp.eq.s32.totalorder %s18, 3
    %p199 = por %p197, %p198
    %p200 = scmp.ne.s32.totalorder %s189, %s190
    %p201 = scmp.eq.s32.totalorder %s18, 0
    %p202 = por %p200, %p201
    %p203 = scmp.ne.s32.totalorder %s189, %s190
    %p204 = scmp.eq.s32.totalorder %s19, 3
    %p205 = por %p203, %p204
    %p207 = scmp.ne.s32.totalorder %s190, %s206
    %p208 = scmp.eq.s32.totalorder %s19, 0
    %p209 = por %p207, %p208
    %p210 = scmp.le.s32.totalorder 1, %s13
    %p211 = scmp.lt.s32.totalorder %s13, 5
    %p212 = pnand %p210, %p211
    %p213 = pneg %p212
    // Predicated region
    $region9: #{tpu_custom_call.1} parent=5 // pred_check
      _
    $region10: #{tpu_custom_call.1} parent=5 // pred_check_branch
      %215 = sbr.rel (%p212) target = $region12
    $region11: #{tpu_custom_call.1} parent=5 // pred_region
      %s216 = ssub.s32 %s13, 1
      // Predicated region
      $region13: #{tpu_custom_call.1} parent=11 // pred_check
        %p217 = pneg %p46
      $region14: #{tpu_custom_call.1} parent=11 // pred_check_branch
        %219 = sbr.rel (%p217) target = $region16
      $region15: #{tpu_custom_call.1} parent=11 // pred_region
        _
      $region16: #{tpu_custom_call.1} parent=11 // pred_fallthru
        _
    $region12: #{tpu_custom_call.1} parent=5 // pred_fallthru
      _
    %p220 = scmp.lt.s32.totalorder %s13, 4
    // Predicated region
    $region17: #{tpu_custom_call.1} parent=5 // pred_check
      %p221 = pneg %p220
    $region18: #{tpu_custom_call.1} parent=5 // pred_check_branch
      %223 = sbr.rel (%p221) target = $region20
    $region19: #{tpu_custom_call.1} parent=5 // pred_region
      // Predicated region
      $region21: #{tpu_custom_call.1} parent=19 // pred_check
        %p224 = pneg %p66
      $region22: #{tpu_custom_call.1} parent=19 // pred_check_branch
        %226 = sbr.rel (%p224) target = $region24
      $region23: #{tpu_custom_call.1} parent=19 // pred_region
        %p227 = scmp.lt.s32.totalorder %s20, 1
        %s228 = scalar_select %p227, %s20, 1
        %s229 = smul.addr %s228, 4
        %s230 = smul.addr %s229, 4
        %s231 = scalar_lea.vmem %s2, %s230
      $region24: #{tpu_custom_call.1} parent=19 // pred_fallthru
        _
      // Predicated region
      $region25: #{tpu_custom_call.1} parent=19 // pred_check
        %p232 = pneg %p92
      $region26: #{tpu_custom_call.1} parent=19 // pred_check_branch
        %234 = sbr.rel (%p232) target = $region28
      $region27: #{tpu_custom_call.1} parent=19 // pred_region
        %p235 = scmp.lt.s32.totalorder %s20, 1
        %s236 = scalar_select %p235, %s20, 1
        %s237 = smul.addr %s236, 4
        %s238 = smul.addr %s237, 4
        %s239 = scalar_lea.vmem %s3, %s238
      $region28: #{tpu_custom_call.1} parent=19 // pred_fallthru
        _
      // Predicated region
      $region29: #{tpu_custom_call.1} parent=19 // pred_check
        %p240 = pneg %p118
      $region30: #{tpu_custom_call.1} parent=19 // pred_check_branch
        %242 = sbr.rel (%p240) target = $region32
      $region31: #{tpu_custom_call.1} parent=19 // pred_region
        %p243 = scmp.lt.s32.totalorder %s20, 1
        %s244 = scalar_select %p243, %s20, 1
        %s245 = smul.addr %s244, 4
        %s246 = smul.addr %s245, 4
        %s247 = scalar_lea.vmem %s4, %s246
      $region32: #{tpu_custom_call.1} parent=19 // pred_fallthru
        _
      // Predicated region
      $region33: #{tpu_custom_call.1} parent=19 // pred_check
        %p248 = pneg %p144
      $region34: #{tpu_custom_call.1} parent=19 // pred_check_branch
        %250 = sbr.rel (%p248) target = $region36
      $region35: #{tpu_custom_call.1} parent=19 // pred_region
        %p251 = scmp.lt.s32.totalorder %s20, 1
        %s252 = scalar_select %p251, %s20, 1
        %s253 = smul.addr %s252, 16
        %s254 = smul.addr %s253, 4
        %s255 = scalar_lea.vmem %s5, %s254
      $region36: #{tpu_custom_call.1} parent=19 // pred_fallthru
        _
      // Predicated region
      $region37: #{tpu_custom_call.1} parent=19 // pred_check
        %p256 = pneg %p170
      $region38: #{tpu_custom_call.1} parent=19 // pred_check_branch
        %258 = sbr.rel (%p256) target = $region40
      $region39: #{tpu_custom_call.1} parent=19 // pred_region
        %p259 = scmp.lt.s32.totalorder %s20, 1
        %s260 = scalar_select %p259, %s20, 1
        %s261 = smul.addr %s260, 8
        %s262 = scalar_lea.vmem %s6, %s261
      $region40: #{tpu_custom_call.1} parent=19 // pred_fallthru
        _
    $region20: #{tpu_custom_call.1} parent=5 // pred_fallthru
      _
    %p263 = scmp.le.s32.totalorder 1, %s13
    %p264 = scmp.lt.s32.totalorder %s13, 5
    %p265 = pnand %p263, %p264
    %p266 = pneg %p265
    // Predicated region
    $region41: #{tpu_custom_call.1} parent=5 // pred_check
      _
    $region42: #{tpu_custom_call.1} parent=5 // pred_check_branch
      %268 = sbr.rel (%p265) target = $region44
    $region43: #{tpu_custom_call.1} parent=5 // pred_region
      %s269 = ssub.s32 %s13, 1
      %p270 = pneg %p46
      %p271 = pneg %p43
      %p272 = scmp.lt.s32.totalorder %s22, 1
      %s273 = scalar_select %p272, %s22, 1
      %s274 = smul.addr %s273, 4
      %s275 = smul.addr %s274, 4
      %s276 = scalar_lea.vmem %s2, %s275
      %p277 = pneg %p72
      %p278 = pneg %p69
      %p279 = scmp.lt.s32.totalorder %s22, 1
      %s280 = scalar_select %p279, %s22, 1
      %s281 = smul.addr %s280, 4
      %s282 = smul.addr %s281, 4
      %s283 = scalar_lea.vmem %s3, %s282
      %p284 = pneg %p98
      %p285 = pneg %p95
      %p286 = scmp.lt.s32.totalorder %s22, 1
      %s287 = scalar_select %p286, %s22, 1
      %s288 = smul.addr %s287, 4
      %s289 = smul.addr %s288, 4
      %s290 = scalar_lea.vmem %s4, %s289
      %p291 = pneg %p124
      %p292 = pneg %p121
      %p293 = scmp.lt.s32.totalorder %s22, 1
      %s294 = scalar_select %p293, %s22, 1
      %s295 = smul.addr %s294, 16
      %s296 = smul.addr %s295, 4
      %s297 = scalar_lea.vmem %s5, %s296
      %p298 = pneg %p150
      %p299 = pneg %p147
      %p300 = scmp.lt.s32.totalorder %s22, 1
      %s301 = scalar_select %p300, %s22, 1
      %s302 = smul.addr %s301, 8
      %s303 = scalar_lea.vmem %s6, %s302
      %p304 = pneg %p176
      %p305 = pneg %p173
      %p306 = pneg %p202
      %p307 = pneg %p199
      %s308 = smul.u32 4, %s23
      %p309 = scmp.lt.s32.totalorder %s308, 7
      %s310 = scalar_select %p309, %s308, 7
      %s311 = smul.addr %s310, 8
      %s312 = scalar_lea.vmem %s7, %s311
      %p313 = scmp.lt.s32.totalorder %s22, 1
      %s314 = scalar_select %p313, %s22, 1
      %s315 = smul.addr %s314, 4
      %s316 = smul.addr %s315, 4
      %s317 = scalar_lea.vmem %s2, %s316
      %p318 = scmp.lt.s32.totalorder %s22, 1
      %s319 = scalar_select %p318, %s22, 1
      %s320 = smul.addr %s319, 4
      %s321 = smul.addr %s320, 4
      %s322 = scalar_lea.vmem %s3, %s321
      %p323 = scmp.lt.s32.totalorder %s22, 1
      %s324 = scalar_select %p323, %s22, 1
      %s325 = smul.addr %s324, 4
      %s326 = smul.addr %s325, 4
      %s327 = scalar_lea.vmem %s4, %s326
      %p328 = scmp.lt.s32.totalorder %s22, 1
      %s329 = scalar_select %p328, %s22, 1
      %s330 = smul.addr %s329, 16
      %s331 = smul.addr %s330, 4
      %s332 = scalar_lea.vmem %s5, %s331
      %p333 = scmp.lt.s32.totalorder %s22, 1
      %s334 = scalar_select %p333, %s22, 1
      %s335 = smul.addr %s334, 8
      %s336 = scalar_lea.vmem %s6, %s335
      %s337 = smul.u32 4, %s23
      %p338 = scmp.lt.s32.totalorder %s337, 7
      %s339 = scalar_select %p338, %s337, 7
      %s340 = smul.addr %s339, 8
      %s341 = scalar_lea.vmem %s7, %s340
      %s342 = smul.u32 4, %s23
      %p344 = scmp.eq.s32.totalorder %s23, 0
      // Predicated region
      $region45: #{tpu_custom_call.1} parent=43 // pred_check
        %p345 = pneg %p344
      $region46: #{tpu_custom_call.1} parent=43 // pred_check_branch
        %347 = sbr.rel (%p345) target = $region48
      $region47: #{tpu_custom_call.1} parent=43 // pred_region
        %p348 = scmp.eq.s32.totalorder %s22, 0
        // Predicated region
        $region49: #{tpu_custom_call.1} parent=47 // pred_check
          %p349 = pneg %p348
        $region50: #{tpu_custom_call.1} parent=47 // pred_check_branch
          %351 = sbr.rel (%p349) target = $region52
        $region51: #{tpu_custom_call.1} parent=47 // pred_region
          $region53: #{tpu_custom_call.1} parent=51
            #allocation5 [shape = 's32[1]{0}', space=sflag, size = 0x4, scoped, tag = 'scoped memory for tpu_custom_call.1']
            // Predicated region
            $region54: #{tpu_custom_call.1} parent=53 // pred_check
              _
            $region55: #{tpu_custom_call.1} parent=53 // pred_check_branch
              %353 = sbr.rel (0) target = $region57
            $region56: #{tpu_custom_call.1} parent=53 // pred_region
              loop: start=0, step=1, limit=1
              $region58: #{tpu_custom_call.1} parent=56 // loop_pre_header
                _
              $region59: #{tpu_custom_call.1} parent=56 // loop_header
                %s355 = sphi 0, %s359
                %p356 = scmp.ge.s32.totalorder %s355, 1
                %s360 = sphi %s0, %s0
                %s361 = sphi [#allocation2], [#allocation2]
              $region60: #{tpu_custom_call.1} parent=56 // loop_header_branch
                %358 = sbr.rel (%p356) target = $region64
              $region61: #{tpu_custom_call.1} parent=56 // loop_body
                %v362 = vld [vmem:[%s360] sm:$0xff]
                %363 = vst [vmem:[%s361] sm:$0xff] %v362
                %v364 = vld [vmem:[%s360 + $0x8] sm:$0xff]
                %365 = vst [vmem:[%s361 + $0x8] sm:$0xff] %v364
                %v366 = vld [vmem:[%s360 + $0x10] sm:$0xff]
                %367 = vst [vmem:[%s361 + $0x10] sm:$0xff] %v366
                %v368 = vld [vmem:[%s360 + $0x18] sm:$0xff]
                %369 = vst [vmem:[%s361 + $0x18] sm:$0xff] %v368
                %v370 = vld [vmem:[%s360 + $0x20] sm:$0xff]
                %371 = vst [vmem:[%s361 + $0x20] sm:$0xff] %v370
                %v372 = vld [vmem:[%s360 + $0x28] sm:$0xff]
                %373 = vst [vmem:[%s361 + $0x28] sm:$0xff] %v372
                %v374 = vld [vmem:[%s360 + $0x30] sm:$0xff]
                %375 = vst [vmem:[%s361 + $0x30] sm:$0xff] %v374
                %v376 = vld [vmem:[%s360 + $0x38] sm:$0xff]
                %377 = vst [vmem:[%s361 + $0x38] sm:$0xff] %v376
              $region62: #{tpu_custom_call.1} parent=56 // loop_footer
                %s359 = sadd.s32 1, %s355
              $region63: #{tpu_custom_call.1} parent=56 // loop_footer_branch
                %354 = sbr.rel target = $region59
              $region64: #{tpu_custom_call.1} parent=56 // loop_exit
                _
            $region57: #{tpu_custom_call.1} parent=53 // pred_fallthru
              _
            // Predicated region
            $region65: #{tpu_custom_call.1} parent=53 // pred_check
              _
            $region66: #{tpu_custom_call.1} parent=53 // pred_check_branch
              %379 = sbr.rel target = $region68
            $region67: #{tpu_custom_call.1} parent=53 // pred_region
              _
            $region68: #{tpu_custom_call.1} parent=53 // pred_fallthru
              _
            // Predicated region
            $region69: #{tpu_custom_call.1} parent=53 // pred_check
              _
            $region70: #{tpu_custom_call.1} parent=53 // pred_check_branch
              %382 = sbr.rel (0) target = $region72
            $region71: #{tpu_custom_call.1} parent=53 // pred_region
              %383 = vsyncadd [#allocation5], 1024
            $region72: #{tpu_custom_call.1} parent=53 // pred_fallthru
              _
            %s384 = smul.u32 64, 1
            %s385 = sshll.u32 %s384, 4
            %386 = dma.done [#allocation5], %s385
        $region52: #{tpu_custom_call.1} parent=47 // pred_fallthru
          _
        %v387 = vld [vmem:[#allocation2] sm:$0xff]
        %v388 = vld [vmem:[#allocation2 + $0x8] sm:$0xff]
        %v389 = vld [vmem:[#allocation2 + $0x10] sm:$0xff]
        %v390 = vld [vmem:[#allocation2 + $0x18] sm:$0xff]
        %v391 = vld [vmem:[#allocation2 + $0x20] sm:$0xff]
        %v392 = vld [vmem:[#allocation2 + $0x28] sm:$0xff]
        %v393 = vld [vmem:[#allocation2 + $0x30] sm:$0xff]
        %v394 = vld [vmem:[#allocation2 + $0x38] sm:$0xff]
        %v395 = vpack.c.bf16 %v388, %v387
        %v396 = vpack.c.bf16 %v390, %v389
        %v397 = vpack.c.bf16 %v392, %v391
        %v398 = vpack.c.bf16 %v394, %v393
        %v399 = vld [vmem:[%s322] sm:$0xf]
        %v400 = vld [vmem:[%s322 + $0x4] sm:$0xf]
        %v401 = vld [vmem:[%s322 + $0x8] sm:$0xf]
        %v402 = vld [vmem:[%s322 + $0xc] sm:$0xf]
        %v407 = vunpack.c.l.b16 %v399
        %v408 = vunpack.c.l.b16 %v400
        %v409 = vunpack.c.l.b16 %v401
        %v410 = vunpack.c.l.b16 %v402
        %v411 = vpack.c.b16 %v408, %v407
        %v412 = vpack.c.b16 %v410, %v409
        %vm415 = vcmask 261120
        %v417 = vsel %vm415, %v395, 0
        %v420 = vsel %vm415, %v396, 0
        %v423 = vsel %vm415, %v397, 0
        %v426 = vsel %vm415, %v398, 0
        %428 = vmatpush.bf16.msra.mxu0 0
        %429 = vmatpush.bf16.msra.mxu0 0
        %430 = vmatpush.bf16.msra.mxu0 0
        %431 = vmatpush.bf16.msra.mxu0 0
        %432 = vmatpush.bf16.msra.mxu0 0
        %433 = vmatpush.bf16.msra.mxu0 0
        %434 = vmatpush.bf16.msra.mxu0 %v412
        %435 = vmatpush.bf16.msra.mxu0 %v411
        %436 = vmatmul.bf16.gmra.mxu0 %v417
        %v437 = vpop.f32.mrf.mxu0
        %v438 = vadd.f32 0.0, %v437
        %v439 = vpop.f32.mrf.mxu0
        %v440 = vadd.f32 0.0, %v439
        %441 = vmatmul.bf16.gmra.mxu0 %v420
        %v442 = vpop.f32.mrf.mxu0
        %v443 = vadd.f32 0.0, %v442
        %v444 = vpop.f32.mrf.mxu0
        %v445 = vadd.f32 0.0, %v444
        %446 = vmatmul.bf16.gmra.mxu0 %v423
        %v447 = vpop.f32.mrf.mxu0
        %v448 = vadd.f32 0.0, %v447
        %v449 = vpop.f32.mrf.mxu0
        %v450 = vadd.f32 0.0, %v449
        %451 = vmatmul.bf16.gmra.mxu0 %v426
        %v452 = vpop.f32.mrf.mxu0
        %v453 = vadd.f32 0.0, %v452
        %v454 = vpop.f32.mrf.mxu0
        %v455 = vadd.f32 0.0, %v454
        %456 = vdwg.mxu0
        %457 = vxpose.xlu0.b32.start [1/16] %v438, 128
        %458 = vxpose.xlu0.b32.cont [2/16] %v440, 128
        %459 = vxpose.xlu0.b32.cont [3/16] %v443, 128
        %460 = vxpose.xlu0.b32.cont [4/16] %v445, 128
        %461 = vxpose.xlu0.b32.cont [5/16] %v448, 128
        %462 = vxpose.xlu0.b32.cont [6/16] %v450, 128
        %463 = vxpose.xlu0.b32.cont [7/16] %v453, 128
        %464 = vxpose.xlu0.b32.cont [8/16] %v455, 128
        %465 = vxpose.xlu0.b32.cont [9/16] 0.0, 128
        %466 = vxpose.xlu0.b32.cont [10/16] 0.0, 128
        %467 = vxpose.xlu0.b32.cont [11/16] 0.0, 128
        %468 = vxpose.xlu0.b32.cont [12/16] 0.0, 128
        %469 = vxpose.xlu0.b32.cont [13/16] 0.0, 128
        %470 = vxpose.xlu0.b32.cont [14/16] 0.0, 128
        %471 = vxpose.xlu0.b32.cont [15/16] 0.0, 128
        %472 = vxpose.xlu0.b32.end [16/16] 0.0, 128
        %v473 = vpop.trf.xlu0
        %v474 = vpop.trf.xlu0
        %v475 = vpop.trf.xlu0
        %v476 = vpop.trf.xlu0
        %v477 = vpop.trf.xlu0
        %v478 = vpop.trf.xlu0
        %v479 = vpop.trf.xlu0
        %v480 = vpop.trf.xlu0
        %v481 = vpop.trf.xlu0
        %v482 = vpop.trf.xlu0
        %v483 = vpop.trf.xlu0
        %v484 = vpop.trf.xlu0
        %v485 = vpop.trf.xlu0
        %v486 = vpop.trf.xlu0
        %v487 = vpop.trf.xlu0
        %v488 = vpop.trf.xlu0
        %v489 = vpack.c.bf16 %v473, %v473
        %vm490 = vcmask 519168
        %491 = vst.msk [vmem:[#allocation3] sm:$0xf] %vm490, %v489
        %v492 = vpack.c.bf16 %v474, %v474
        %s493 = scalar_lea.vmem [#allocation3], 4
        %494 = vst.msk [vmem:[%s493] sm:$0xf] %vm490, %v492
        %v495 = vpack.c.bf16 %v475, %v475
        %s496 = scalar_lea.vmem [#allocation3], 8
        %497 = vst.msk [vmem:[%s496] sm:$0xf] %vm490, %v495
        %v498 = vpack.c.bf16 %v476, %v476
        %s499 = scalar_lea.vmem [#allocation3], 12
        %500 = vst.msk [vmem:[%s499] sm:$0xf] %vm490, %v498
        %v501 = vpack.c.bf16 %v438, %v438
        %v502 = vpack.c.bf16 %v440, %v440
        %v503 = vpack.c.bf16 %v443, %v443
        %v504 = vpack.c.bf16 %v445, %v445
        %v505 = vpack.c.bf16 %v448, %v448
        %v506 = vpack.c.bf16 %v450, %v450
        %v507 = vpack.c.bf16 %v453, %v453
        %v508 = vpack.c.bf16 %v455, %v455
        %517 = vrot.lane.b32.xlu0 %v501, 96
        %v518 = vpop.permute.xlu0 %517
        %519 = vrot.lane.b32.xlu0 %v502, 96
        %v520 = vpop.permute.xlu0 %519
        %521 = vrot.lane.b32.xlu0 %v503, 96
        %v522 = vpop.permute.xlu0 %521
        %523 = vrot.lane.b32.xlu0 %v504, 96
        %v524 = vpop.permute.xlu0 %523
        %525 = vrot.lane.b32.xlu0 %v505, 96
        %v526 = vpop.permute.xlu0 %525
        %527 = vrot.lane.b32.xlu0 %v506, 96
        %v528 = vpop.permute.xlu0 %527
        %529 = vrot.lane.b32.xlu0 %v507, 96
        %v530 = vpop.permute.xlu0 %529
        %531 = vrot.lane.b32.xlu0 %v508, 96
        %v532 = vpop.permute.xlu0 %531
        %vm541 = vcmask 257024
        %542 = vst.msk [vmem:[#allocation4] sm:$0xf] %vm541, %v518
        %543 = vst.msk [vmem:[#allocation4 + $0x4] sm:$0xf] %vm541, %v520
        %544 = vst.msk [vmem:[#allocation4 + $0x8] sm:$0xf] %vm541, %v522
        %545 = vst.msk [vmem:[#allocation4 + $0xc] sm:$0xf] %vm541, %v524
        %546 = vst.msk [vmem:[#allocation4 + $0x10] sm:$0xf] %vm541, %v526
        %547 = vst.msk [vmem:[#allocation4 + $0x14] sm:$0xf] %vm541, %v528
        %548 = vst.msk [vmem:[#allocation4 + $0x18] sm:$0xf] %vm541, %v530
        %549 = vst.msk [vmem:[#allocation4 + $0x1c] sm:$0xf] %vm541, %v532
      $region48: #{tpu_custom_call.1} parent=43 // pred_fallthru
        _
      %s550 = smul.u32 %s23, 32
      %s551 = sshra.s32 %s550, 5
      %s552 = sand.u32 %s550, 31
      %s553 = smul.addr %s551, 8
      %s554 = scalar_lea.vmem %s1, %s553
      %v555 = vld [vmem:[%s554] sm:$0xff]
      %v556 = vunpack.c.0.s8 %v555
      %v557 = vunpack.c.1.s8 %v555
      %v558 = vunpack.c.2.s8 %v555
      %v559 = vunpack.c.3.s8 %v555
      %v560 = vcvt.s32.f32 %v556
      %v561 = vcvt.s32.f32 %v557
      %v562 = vcvt.s32.f32 %v558
      %v563 = vcvt.s32.f32 %v559
      %v564 = vsub.f32 %v560, 1.0
      %v565 = vsub.f32 %v561, 1.0
      %v566 = vsub.f32 %v562, 1.0
      %v567 = vsub.f32 %v563, 1.0
      %v568 = vmul.f32 %v564, 1e+30
      %v569 = vmul.f32 %v565, 1e+30
      %v570 = vmul.f32 %v566, 1e+30
      %v571 = vmul.f32 %v567, 1e+30
      %s572 = scalar_lea.vmem [#allocation2], %s550
      %v573 = vld [vmem:[%s572] sm:$0xff]
      %v574 = vld [vmem:[%s572 + $0x8] sm:$0xff]
      %v575 = vld [vmem:[%s572 + $0x10] sm:$0xff]
      %v576 = vld [vmem:[%s572 + $0x18] sm:$0xff]
      %v577 = vpack.c.bf16 %v574, %v573
      %v578 = vpack.c.bf16 %v576, %v575
      %v579 = vld [vmem:[%s317] sm:$0xf]
      %v580 = vld [vmem:[%s317 + $0x4] sm:$0xf]
      %v581 = vld [vmem:[%s317 + $0x8] sm:$0xf]
      %v582 = vld [vmem:[%s317 + $0xc] sm:$0xf]
      %v587 = vunpack.c.l.b16 %v579
      %v588 = vunpack.c.l.b16 %v580
      %v589 = vunpack.c.l.b16 %v581
      %v590 = vunpack.c.l.b16 %v582
      %v591 = vpack.c.b16 %v588, %v587
      %v592 = vpack.c.b16 %v590, %v589
      %vm595 = vcmask 261120
      %v597 = vsel %vm595, %v577, 0
      %v600 = vsel %vm595, %v578, 0
      %602 = vmatpush.bf16.msra.mxu0 0
      %603 = vmatpush.bf16.msra.mxu0 0
      %604 = vmatpush.bf16.msra.mxu0 0
      %605 = vmatpush.bf16.msra.mxu0 0
      %606 = vmatpush.bf16.msra.mxu0 0
      %607 = vmatpush.bf16.msra.mxu0 0
      %608 = vmatpush.bf16.msra.mxu0 %v592
      %609 = vmatpush.bf16.msra.mxu0 %v591
      %610 = vmatmul.bf16.gmra.mxu0 %v597
      %v611 = vpop.f32.mrf.mxu0
      %v612 = vadd.f32 0.0, %v611
      %v613 = vpop.f32.mrf.mxu0
      %v614 = vadd.f32 0.0, %v613
      %615 = vmatmul.bf16.gmra.mxu0 %v600
      %v616 = vpop.f32.mrf.mxu0
      %v617 = vadd.f32 0.0, %v616
      %v618 = vpop.f32.mrf.mxu0
      %v619 = vadd.f32 0.0, %v618
      %620 = vdwg.mxu0
      %v621 = vpack.c.bf16 %v612, %v612
      %v622 = vpack.c.bf16 %v614, %v614
      %v623 = vpack.c.bf16 %v617, %v617
      %v624 = vpack.c.bf16 %v619, %v619
      %v625 = vld [vmem:[#allocation3] sm:$0xf]
      %v630 = vunpack.c.l.b16 %v621
      %v631 = vunpack.c.l.b16 %v622
      %v632 = vunpack.c.l.b16 %v623
      %v633 = vunpack.c.l.b16 %v624
      %v634 = vpack.c.b16 %v631, %v630
      %v635 = vpack.c.b16 %v633, %v632
      %vm636 = vcmask 64512
      %v638 = vsel %vm636, %v634, 0
      %v641 = vsel %vm636, %v635, 0
      %vm643 = vcmask 1043456
      %v645 = vsel %vm643, %v625, 0
      %647 = vmatpush.bf16.msra.mxu0 0
      %648 = vmatpush.bf16.msra.mxu0 0
      %649 = vmatpush.bf16.msra.mxu0 0
      %650 = vmatpush.bf16.msra.mxu0 0
      %651 = vmatpush.bf16.msra.mxu0 0
      %652 = vmatpush.bf16.msra.mxu0 0
      %653 = vmatpush.bf16.msra.mxu0 0
      %654 = vmatpush.bf16.msra.mxu0 %v645
      %655 = vmatmul.bf16.gmra.mxu0 %v638
      %v656 = vpop.f32.mrf.mxu0
      %v657 = vadd.f32 %v568, %v656
      %v658 = vpop.f32.mrf.mxu0
      %v659 = vadd.f32 %v569, %v658
      %660 = vmatmul.bf16.gmra.mxu0 %v641
      %v661 = vpop.f32.mrf.mxu0
      %v662 = vadd.f32 %v570, %v661
      %v663 = vpop.f32.mrf.mxu0
      %v664 = vadd.f32 %v571, %v663
      %665 = vdwg.mxu0
      %vm666 = vcmask 523264
      %v667 = vsel %vm666, %v657, -inf
      %668 = vmax.xlane.f32.xlu0 %v667
      %v669 = vpop.xlane.xlu0 %668
      %v670 = vsel %vm666, %v659, -inf
      %671 = vmax.xlane.f32.xlu0 %v670
      %v672 = vpop.xlane.xlu0 %671
      %v673 = vsel %vm666, %v662, -inf
      %674 = vmax.xlane.f32.xlu0 %v673
      %v675 = vpop.xlane.xlu0 %674
      %v676 = vsel %vm666, %v664, -inf
      %677 = vmax.xlane.f32.xlu0 %v676
      %v678 = vpop.xlane.xlu0 %677
      %v679 = vsub.f32 %v657, %v669
      %v680 = vsub.f32 %v659, %v672
      %v681 = vsub.f32 %v662, %v675
      %v682 = vsub.f32 %v664, %v678
      %v683 = vmul.f32 %v679, 1.442695
      %v684 = vpow.pop %v683
      %v685 = vmul.f32 %v680, 1.442695
      %v686 = vpow.pop %v685
      %v687 = vmul.f32 %v681, 1.442695
      %v688 = vpow.pop %v687
      %v689 = vmul.f32 %v682, 1.442695
      %v690 = vpow.pop %v689
      %v691 = vsel %vm666, %v684, 0.0
      %692 = vadd.xlane.f32.xlu0 %v691
      %v693 = vpop.xlane.xlu0 %692
      %v694 = vsel %vm666, %v686, 0.0
      %695 = vadd.xlane.f32.xlu0 %v694
      %v696 = vpop.xlane.xlu0 %695
      %v697 = vsel %vm666, %v688, 0.0
      %698 = vadd.xlane.f32.xlu0 %v697
      %v699 = vpop.xlane.xlu0 %698
      %v700 = vsel %vm666, %v690, 0.0
      %701 = vadd.xlane.f32.xlu0 %v700
      %v702 = vpop.xlane.xlu0 %701
      %v703 = vmax.f32 %v693, 1e-20
      %v704 = vmax.f32 %v696, 1e-20
      %v705 = vmax.f32 %v699, 1e-20
      %v706 = vmax.f32 %v702, 1e-20
      %v707 = vrcp.pop %v703
      %v708 = vrcp.pop %v704
      %v709 = vrcp.pop %v705
      %v710 = vrcp.pop %v706
      %v711 = vpack.c.bf16 %v686, %v684
      %v712 = vpack.c.bf16 %v690, %v688
      %v713 = vld [vmem:[#allocation4] sm:$0xf]
      %v714 = vld [vmem:[#allocation4 + $0x4] sm:$0xf]
      %v715 = vld [vmem:[#allocation4 + $0x8] sm:$0xf]
      %v716 = vld [vmem:[#allocation4 + $0xc] sm:$0xf]
      %v717 = vld [vmem:[#allocation4 + $0x10] sm:$0xf]
      %v718 = vld [vmem:[#allocation4 + $0x14] sm:$0xf]
      %v719 = vld [vmem:[#allocation4 + $0x18] sm:$0xf]
      %v720 = vld [vmem:[#allocation4 + $0x1c] sm:$0xf]
      %v729 = vunpack.c.l.b16 %v713
      %v730 = vunpack.c.l.b16 %v714
      %v731 = vunpack.c.l.b16 %v715
      %v732 = vunpack.c.l.b16 %v716
      %v733 = vunpack.c.l.b16 %v717
      %v734 = vunpack.c.l.b16 %v718
      %v735 = vunpack.c.l.b16 %v719
      %v736 = vunpack.c.l.b16 %v720
      %v737 = vpack.c.b16 %v730, %v729
      %v738 = vpack.c.b16 %v732, %v731
      %v739 = vpack.c.b16 %v734, %v733
      %v740 = vpack.c.b16 %v736, %v735
      %v746 = vsel %vm666, %v711, 0
      %v749 = vsel %vm666, %v712, 0
      %751 = vmatpush.bf16.msra.mxu0 0
      %752 = vmatpush.bf16.msra.mxu0 0
      %753 = vmatpush.bf16.msra.mxu0 0
      %754 = vmatpush.bf16.msra.mxu0 0
      %755 = vmatpush.bf16.msra.mxu0 %v740
      %756 = vmatpush.bf16.msra.mxu0 %v739
      %757 = vmatpush.bf16.msra.mxu0 %v738
      %758 = vmatpush.bf16.msra.mxu0 %v737
      %759 = vmatmul.bf16.gmra.mxu0 %v746
      %v760 = vpop.f32.mrf.mxu0
      %v761 = vadd.f32 0.0, %v760
      %v762 = vpop.f32.mrf.mxu0
      %v763 = vadd.f32 0.0, %v762
      %764 = vmatmul.bf16.gmra.mxu0 %v749
      %v765 = vpop.f32.mrf.mxu0
      %v766 = vadd.f32 0.0, %v765
      %v767 = vpop.f32.mrf.mxu0
      %v768 = vadd.f32 0.0, %v767
      %769 = vdwg.mxu0
      %v770 = vmul.f32 %v761, %v707
      %v771 = vmul.f32 %v763, %v708
      %v772 = vmul.f32 %v766, %v709
      %v773 = vmul.f32 %v768, %v710
      %s774 = scalar_lea.vmem [#allocation3], 4
      %v775 = vld [vmem:[%s774] sm:$0xf]
      %776 = vrot.lane.b32.xlu0 %v634, 120
      %v777 = vpop.permute.xlu0 %776
      %778 = vrot.lane.b32.xlu0 %v635, 120
      %v779 = vpop.permute.xlu0 %778
      %v781 = vsel %vm636, %v777, 0
      %v784 = vsel %vm636, %v779, 0
      %v787 = vsel %vm643, %v775, 0
      %789 = vmatpush.bf16.msra.mxu0 0
      %790 = vmatpush.bf16.msra.mxu0 0
      %791 = vmatpush.bf16.msra.mxu0 0
      %792 = vmatpush.bf16.msra.mxu0 0
      %793 = vmatpush.bf16.msra.mxu0 0
      %794 = vmatpush.bf16.msra.mxu0 0
      %795 = vmatpush.bf16.msra.mxu0 0
      %796 = vmatpush.bf16.msra.mxu0 %v787
      %797 = vmatmul.bf16.gmra.mxu0 %v781
      %v798 = vpop.f32.mrf.mxu0
      %v799 = vadd.f32 %v568, %v798
      %v800 = vpop.f32.mrf.mxu0
      %v801 = vadd.f32 %v569, %v800
      %802 = vmatmul.bf16.gmra.mxu0 %v784
      %v803 = vpop.f32.mrf.mxu0
      %v804 = vadd.f32 %v570, %v803
      %v805 = vpop.f32.mrf.mxu0
      %v806 = vadd.f32 %v571, %v805
      %807 = vdwg.mxu0
      %v808 = vsel %vm666, %v799, -inf
      %809 = vmax.xlane.f32.xlu0 %v808
      %v810 = vpop.xlane.xlu0 %809
      %v811 = vsel %vm666, %v801, -inf
      %812 = vmax.xlane.f32.xlu0 %v811
      %v813 = vpop.xlane.xlu0 %812
      %v814 = vsel %vm666, %v804, -inf
      %815 = vmax.xlane.f32.xlu0 %v814
      %v816 = vpop.xlane.xlu0 %815
      %v817 = vsel %vm666, %v806, -inf
      %818 = vmax.xlane.f32.xlu0 %v817
      %v819 = vpop.xlane.xlu0 %818
      %v820 = vsub.f32 %v799, %v810
      %v821 = vsub.f32 %v801, %v813
      %v822 = vsub.f32 %v804, %v816
      %v823 = vsub.f32 %v806, %v819
      %v824 = vmul.f32 %v820, 1.442695
      %v825 = vpow.pop %v824
      %v826 = vmul.f32 %v821, 1.442695
      %v827 = vpow.pop %v826
      %v828 = vmul.f32 %v822, 1.442695
      %v829 = vpow.pop %v828
      %v830 = vmul.f32 %v823, 1.442695
      %v831 = vpow.pop %v830
      %v832 = vsel %vm666, %v825, 0.0
      %833 = vadd.xlane.f32.xlu0 %v832
      %v834 = vpop.xlane.xlu0 %833
      %v835 = vsel %vm666, %v827, 0.0
      %836 = vadd.xlane.f32.xlu0 %v835
      %v837 = vpop.xlane.xlu0 %836
      %v838 = vsel %vm666, %v829, 0.0
      %839 = vadd.xlane.f32.xlu0 %v838
      %v840 = vpop.xlane.xlu0 %839
      %v841 = vsel %vm666, %v831, 0.0
      %842 = vadd.xlane.f32.xlu0 %v841
      %v843 = vpop.xlane.xlu0 %842
      %v844 = vmax.f32 %v834, 1e-20
      %v845 = vmax.f32 %v837, 1e-20
      %v846 = vmax.f32 %v840, 1e-20
      %v847 = vmax.f32 %v843, 1e-20
      %v848 = vrcp.pop %v844
      %v849 = vrcp.pop %v845
      %v850 = vrcp.pop %v846
      %v851 = vrcp.pop %v847
      %v852 = vpack.c.bf16 %v827, %v825
      %v853 = vpack.c.bf16 %v831, %v829
      %854 = vrot.lane.b32.xlu0 %v737, 120
      %v855 = vpop.permute.xlu0 %854
      %856 = vrot.lane.b32.xlu0 %v738, 120
      %v857 = vpop.permute.xlu0 %856
      %858 = vrot.lane.b32.xlu0 %v739, 120
      %v859 = vpop.permute.xlu0 %858
      %860 = vrot.lane.b32.xlu0 %v740, 120
      %v861 = vpop.permute.xlu0 %860
      %v867 = vsel %vm666, %v852, 0
      %v870 = vsel %vm666, %v853, 0
      %872 = vmatpush.bf16.msra.mxu0 0
      %873 = vmatpush.bf16.msra.mxu0 0
      %874 = vmatpush.bf16.msra.mxu0 0
      %875 = vmatpush.bf16.msra.mxu0 0
      %876 = vmatpush.bf16.msra.mxu0 %v861
      %877 = vmatpush.bf16.msra.mxu0 %v859
      %878 = vmatpush.bf16.msra.mxu0 %v857
      %879 = vmatpush.bf16.msra.mxu0 %v855
      %880 = vmatmul.bf16.gmra.mxu0 %v867
      %v881 = vpop.f32.mrf.mxu0
      %v882 = vadd.f32 0.0, %v881
      %v883 = vpop.f32.mrf.mxu0
      %v884 = vadd.f32 0.0, %v883
      %885 = vmatmul.bf16.gmra.mxu0 %v870
      %v886 = vpop.f32.mrf.mxu0
      %v887 = vadd.f32 0.0, %v886
      %v888 = vpop.f32.mrf.mxu0
      %v889 = vadd.f32 0.0, %v888
      %890 = vdwg.mxu0
      %v891 = vmul.f32 %v882, %v848
      %v892 = vmul.f32 %v884, %v849
      %v893 = vmul.f32 %v887, %v850
      %v894 = vmul.f32 %v889, %v851
      %s895 = scalar_lea.vmem [#allocation3], 8
      %v896 = vld [vmem:[%s895] sm:$0xf]
      %897 = vrot.lane.b32.xlu0 %v634, 112
      %v898 = vpop.permute.xlu0 %897
      %899 = vrot.lane.b32.xlu0 %v635, 112
      %v900 = vpop.permute.xlu0 %899
      %v902 = vsel %vm636, %v898, 0
      %v905 = vsel %vm636, %v900, 0
      %v908 = vsel %vm643, %v896, 0
      %910 = vmatpush.bf16.msra.mxu0 0
      %911 = vmatpush.bf16.msra.mxu0 0
      %912 = vmatpush.bf16.msra.mxu0 0
      %913 = vmatpush.bf16.msra.mxu0 0
      %914 = vmatpush.bf16.msra.mxu0 0
      %915 = vmatpush.bf16.msra.mxu0 0
      %916 = vmatpush.bf16.msra.mxu0 0
      %917 = vmatpush.bf16.msra.mxu0 %v908
      %918 = vmatmul.bf16.gmra.mxu0 %v902
      %v919 = vpop.f32.mrf.mxu0
      %v920 = vadd.f32 %v568, %v919
      %v921 = vpop.f32.mrf.mxu0
      %v922 = vadd.f32 %v569, %v921
      %923 = vmatmul.bf16.gmra.mxu0 %v905
      %v924 = vpop.f32.mrf.mxu0
      %v925 = vadd.f32 %v570, %v924
      %v926 = vpop.f32.mrf.mxu0
      %v927 = vadd.f32 %v571, %v926
      %928 = vdwg.mxu0
      %v929 = vsel %vm666, %v920, -inf
      %930 = vmax.xlane.f32.xlu0 %v929
      %v931 = vpop.xlane.xlu0 %930
      %v932 = vsel %vm666, %v922, -inf
      %933 = vmax.xlane.f32.xlu0 %v932
      %v934 = vpop.xlane.xlu0 %933
      %v935 = vsel %vm666, %v925, -inf
      %936 = vmax.xlane.f32.xlu0 %v935
      %v937 = vpop.xlane.xlu0 %936
      %v938 = vsel %vm666, %v927, -inf
      %939 = vmax.xlane.f32.xlu0 %v938
      %v940 = vpop.xlane.xlu0 %939
      %v941 = vsub.f32 %v920, %v931
      %v942 = vsub.f32 %v922, %v934
      %v943 = vsub.f32 %v925, %v937
      %v944 = vsub.f32 %v927, %v940
      %v945 = vmul.f32 %v941, 1.442695
      %v946 = vpow.pop %v945
      %v947 = vmul.f32 %v942, 1.442695
      %v948 = vpow.pop %v947
      %v949 = vmul.f32 %v943, 1.442695
      %v950 = vpow.pop %v949
      %v951 = vmul.f32 %v944, 1.442695
      %v952 = vpow.pop %v951
      %v953 = vsel %vm666, %v946, 0.0
      %954 = vadd.xlane.f32.xlu0 %v953
      %v955 = vpop.xlane.xlu0 %954
      %v956 = vsel %vm666, %v948, 0.0
      %957 = vadd.xlane.f32.xlu0 %v956
      %v958 = vpop.xlane.xlu0 %957
      %v959 = vsel %vm666, %v950, 0.0
      %960 = vadd.xlane.f32.xlu0 %v959
      %v961 = vpop.xlane.xlu0 %960
      %v962 = vsel %vm666, %v952, 0.0
      %963 = vadd.xlane.f32.xlu0 %v962
      %v964 = vpop.xlane.xlu0 %963
      %v965 = vmax.f32 %v955, 1e-20
      %v966 = vmax.f32 %v958, 1e-20
      %v967 = vmax.f32 %v961, 1e-20
      %v968 = vmax.f32 %v964, 1e-20
      %v969 = vrcp.pop %v965
      %v970 = vrcp.pop %v966
      %v971 = vrcp.pop %v967
      %v972 = vrcp.pop %v968
      %v973 = vpack.c.bf16 %v948, %v946
      %v974 = vpack.c.bf16 %v952, %v950
      %975 = vrot.lane.b32.xlu0 %v737, 112
      %v976 = vpop.permute.xlu0 %975
      %977 = vrot.lane.b32.xlu0 %v738, 112
      %v978 = vpop.permute.xlu0 %977
      %979 = vrot.lane.b32.xlu0 %v739, 112
      %v980 = vpop.permute.xlu0 %979
      %981 = vrot.lane.b32.xlu0 %v740, 112
      %v982 = vpop.permute.xlu0 %981
      %v988 = vsel %vm666, %v973, 0
      %v991 = vsel %vm666, %v974, 0
      %993 = vmatpush.bf16.msra.mxu0 0
      %994 = vmatpush.bf16.msra.mxu0 0
      %995 = vmatpush.bf16.msra.mxu0 0
      %996 = vmatpush.bf16.msra.mxu0 0
      %997 = vmatpush.bf16.msra.mxu0 %v982
      %998 = vmatpush.bf16.msra.mxu0 %v980
      %999 = vmatpush.bf16.msra.mxu0 %v978
      %1000 = vmatpush.bf16.msra.mxu0 %v976
      %1001 = vmatmul.bf16.gmra.mxu0 %v988
      %v1002 = vpop.f32.mrf.mxu0
      %v1003 = vadd.f32 0.0, %v1002
      %v1004 = vpop.f32.mrf.mxu0
      %v1005 = vadd.f32 0.0, %v1004
      %1006 = vmatmul.bf16.gmra.mxu0 %v991
      %v1007 = vpop.f32.mrf.mxu0
      %v1008 = vadd.f32 0.0, %v1007
      %v1009 = vpop.f32.mrf.mxu0
      %v1010 = vadd.f32 0.0, %v1009
      %1011 = vdwg.mxu0
      %v1012 = vmul.f32 %v1003, %v969
      %v1013 = vmul.f32 %v1005, %v970
      %v1014 = vmul.f32 %v1008, %v971
      %v1015 = vmul.f32 %v1010, %v972
      %s1016 = scalar_lea.vmem [#allocation3], 12
      %v1017 = vld [vmem:[%s1016] sm:$0xf]
      %1018 = vrot.lane.b32.xlu0 %v634, 104
      %v1019 = vpop.permute.xlu0 %1018
      %1020 = vrot.lane.b32.xlu0 %v635, 104
      %v1021 = vpop.permute.xlu0 %1020
      %v1023 = vsel %vm636, %v1019, 0
      %v1026 = vsel %vm636, %v1021, 0
      %v1029 = vsel %vm643, %v1017, 0
      %1031 = vmatpush.bf16.msra.mxu0 0
      %1032 = vmatpush.bf16.msra.mxu0 0
      %1033 = vmatpush.bf16.msra.mxu0 0
      %1034 = vmatpush.bf16.msra.mxu0 0
      %1035 = vmatpush.bf16.msra.mxu0 0
      %1036 = vmatpush.bf16.msra.mxu0 0
      %1037 = vmatpush.bf16.msra.mxu0 0
      %1038 = vmatpush.bf16.msra.mxu0 %v1029
      %1039 = vmatmul.bf16.gmra.mxu0 %v1023
      %v1040 = vpop.f32.mrf.mxu0
      %v1041 = vadd.f32 %v568, %v1040
      %v1042 = vpop.f32.mrf.mxu0
      %v1043 = vadd.f32 %v569, %v1042
      %1044 = vmatmul.bf16.gmra.mxu0 %v1026
      %v1045 = vpop.f32.mrf.mxu0
      %v1046 = vadd.f32 %v570, %v1045
      %v1047 = vpop.f32.mrf.mxu0
      %v1048 = vadd.f32 %v571, %v1047
      %1049 = vdwg.mxu0
      %v1050 = vsel %vm666, %v1041, -inf
      %1051 = vmax.xlane.f32.xlu0 %v1050
      %v1052 = vpop.xlane.xlu0 %1051
      %v1053 = vsel %vm666, %v1043, -inf
      %1054 = vmax.xlane.f32.xlu0 %v1053
      %v1055 = vpop.xlane.xlu0 %1054
      %v1056 = vsel %vm666, %v1046, -inf
      %1057 = vmax.xlane.f32.xlu0 %v1056
      %v1058 = vpop.xlane.xlu0 %1057
      %v1059 = vsel %vm666, %v1048, -inf
      %1060 = vmax.xlane.f32.xlu0 %v1059
      %v1061 = vpop.xlane.xlu0 %1060
      %v1062 = vsub.f32 %v1041, %v1052
      %v1063 = vsub.f32 %v1043, %v1055
      %v1064 = vsub.f32 %v1046, %v1058
      %v1065 = vsub.f32 %v1048, %v1061
      %v1066 = vmul.f32 %v1062, 1.442695
      %v1067 = vpow.pop %v1066
      %v1068 = vmul.f32 %v1063, 1.442695
      %v1069 = vpow.pop %v1068
      %v1070 = vmul.f32 %v1064, 1.442695
      %v1071 = vpow.pop %v1070
      %v1072 = vmul.f32 %v1065, 1.442695
      %v1073 = vpow.pop %v1072
      %v1074 = vsel %vm666, %v1067, 0.0
      %1075 = vadd.xlane.f32.xlu0 %v1074
      %v1076 = vpop.xlane.xlu0 %1075
      %v1077 = vsel %vm666, %v1069, 0.0
      %1078 = vadd.xlane.f32.xlu0 %v1077
      %v1079 = vpop.xlane.xlu0 %1078
      %v1080 = vsel %vm666, %v1071, 0.0
      %1081 = vadd.xlane.f32.xlu0 %v1080
      %v1082 = vpop.xlane.xlu0 %1081
      %v1083 = vsel %vm666, %v1073, 0.0
      %1084 = vadd.xlane.f32.xlu0 %v1083
      %v1085 = vpop.xlane.xlu0 %1084
      %v1086 = vmax.f32 %v1076, 1e-20
      %v1087 = vmax.f32 %v1079, 1e-20
      %v1088 = vmax.f32 %v1082, 1e-20
      %v1089 = vmax.f32 %v1085, 1e-20
      %v1090 = vrcp.pop %v1086
      %v1091 = vrcp.pop %v1087
      %v1092 = vrcp.pop %v1088
      %v1093 = vrcp.pop %v1089
      %v1094 = vpack.c.bf16 %v1069, %v1067
      %v1095 = vpack.c.bf16 %v1073, %v1071
      %1096 = vrot.lane.b32.xlu0 %v737, 104
      %v1097 = vpop.permute.xlu0 %1096
      %1098 = vrot.lane.b32.xlu0 %v738, 104
      %v1099 = vpop.permute.xlu0 %1098
      %1100 = vrot.lane.b32.xlu0 %v739, 104
      %v1101 = vpop.permute.xlu0 %1100
      %1102 = vrot.lane.b32.xlu0 %v740, 104
      %v1103 = vpop.permute.xlu0 %1102
      %v1109 = vsel %vm666, %v1094, 0
      %v1112 = vsel %vm666, %v1095, 0
      %1114 = vmatpush.bf16.msra.mxu0 0
      %1115 = vmatpush.bf16.msra.mxu0 0
      %1116 = vmatpush.bf16.msra.mxu0 0
      %1117 = vmatpush.bf16.msra.mxu0 0
      %1118 = vmatpush.bf16.msra.mxu0 %v1103
      %1119 = vmatpush.bf16.msra.mxu0 %v1101
      %1120 = vmatpush.bf16.msra.mxu0 %v1099
      %1121 = vmatpush.bf16.msra.mxu0 %v1097
      %1122 = vmatmul.bf16.gmra.mxu0 %v1109
      %v1123 = vpop.f32.mrf.mxu0
      %v1124 = vadd.f32 0.0, %v1123
      %v1125 = vpop.f32.mrf.mxu0
      %v1126 = vadd.f32 0.0, %v1125
      %1127 = vmatmul.bf16.gmra.mxu0 %v1112
      %v1128 = vpop.f32.mrf.mxu0
      %v1129 = vadd.f32 0.0, %v1128
      %v1130 = vpop.f32.mrf.mxu0
      %v1131 = vadd.f32 0.0, %v1130
      %1132 = vdwg.mxu0
      %v1133 = vmul.f32 %v1124, %v1090
      %v1134 = vmul.f32 %v1126, %v1091
      %v1135 = vmul.f32 %v1129, %v1092
      %v1136 = vmul.f32 %v1131, %v1093
      %1141 = vrot.lane.b32.xlu0 %v891, 8
      %v1142 = vpop.permute.xlu0 %1141
      %1143 = vrot.lane.b32.xlu0 %v892, 8
      %v1144 = vpop.permute.xlu0 %1143
      %1145 = vrot.lane.b32.xlu0 %v893, 8
      %v1146 = vpop.permute.xlu0 %1145
      %1147 = vrot.lane.b32.xlu0 %v894, 8
      %v1148 = vpop.permute.xlu0 %1147
      %1157 = vrot.lane.b32.xlu0 %v1012, 16
      %v1158 = vpop.permute.xlu0 %1157
      %1159 = vrot.lane.b32.xlu0 %v1013, 16
      %v1160 = vpop.permute.xlu0 %1159
      %1161 = vrot.lane.b32.xlu0 %v1014, 16
      %v1162 = vpop.permute.xlu0 %1161
      %1163 = vrot.lane.b32.xlu0 %v1015, 16
      %v1164 = vpop.permute.xlu0 %1163
      %1173 = vrot.lane.b32.xlu0 %v1133, 24
      %v1174 = vpop.permute.xlu0 %1173
      %1175 = vrot.lane.b32.xlu0 %v1134, 24
      %v1176 = vpop.permute.xlu0 %1175
      %1177 = vrot.lane.b32.xlu0 %v1135, 24
      %v1178 = vpop.permute.xlu0 %1177
      %1179 = vrot.lane.b32.xlu0 %v1136, 24
      %v1180 = vpop.permute.xlu0 %1179
      %v1185 = vsel %vm636, %v770, %v1142
      %v1186 = vsel %vm636, %v771, %v1144
      %v1187 = vsel %vm636, %v772, %v1146
      %v1188 = vsel %vm636, %v773, %v1148
      %vm1189 = vcmask 130048
      %v1190 = vsel %vm1189, %v1185, %v1158
      %v1191 = vsel %vm1189, %v1186, %v1160
      %v1192 = vsel %vm1189, %v1187, %v1162
      %v1193 = vsel %vm1189, %v1188, %v1164
      %vm1194 = vcmask 195584
      %v1195 = vsel %vm1194, %v1190, %v1174
      %v1196 = vsel %vm1194, %v1191, %v1176
      %v1197 = vsel %vm1194, %v1192, %v1178
      %v1198 = vsel %vm1194, %v1193, %v1180
      %v1199 = vld [vmem:[%s336] sm:$0xff]
      %v1200 = vadd.f32 %v1195, %v573
      %v1201 = vadd.f32 %v1196, %v574
      %v1202 = vadd.f32 %v1197, %v575
      %v1203 = vadd.f32 %v1198, %v576
      %v1204 = vsel %vm595, %v1200, 0.0
      %1205 = vadd.xlane.f32.xlu0 %v1204
      %v1206 = vpop.xlane.xlu0 %1205
      %v1207 = vsel %vm595, %v1201, 0.0
      %1208 = vadd.xlane.f32.xlu0 %v1207
      %v1209 = vpop.xlane.xlu0 %1208
      %v1210 = vsel %vm595, %v1202, 0.0
      %1211 = vadd.xlane.f32.xlu0 %v1210
      %v1212 = vpop.xlane.xlu0 %1211
      %v1213 = vsel %vm595, %v1203, 0.0
      %1214 = vadd.xlane.f32.xlu0 %v1213
      %v1215 = vpop.xlane.xlu0 %1214
      %v1216 = vrcp.pop 32.0
      %v1217 = vmul.f32 32.0, %v1216
      %v1218 = vsub.f32 1.0, %v1217
      %v1219 = vmul.f32 %v1216, %v1218
      %v1220 = vadd.f32 %v1216, %v1219
      %vm1221 = vweird.f32 %v1216
      %v1222 = vsel %vm1221, %v1216, %v1220
      %v1223 = vmul.f32 %v1206, %v1222
      %v1224 = vmul.f32 %v1209, %v1222
      %v1225 = vmul.f32 %v1212, %v1222
      %v1226 = vmul.f32 %v1215, %v1222
      %v1227 = vsub.f32 %v1200, %v1223
      %v1228 = vsub.f32 %v1201, %v1224
      %v1229 = vsub.f32 %v1202, %v1225
      %v1230 = vsub.f32 %v1203, %v1226
      %v1231 = vmul.f32 %v1227, %v1227
      %v1232 = vmul.f32 %v1228, %v1228
      %v1233 = vmul.f32 %v1229, %v1229
      %v1234 = vmul.f32 %v1230, %v1230
      %v1235 = vsel %vm595, %v1231, 0.0
      %1236 = vadd.xlane.f32.xlu0 %v1235
      %v1237 = vpop.xlane.xlu0 %1236
      %v1238 = vsel %vm595, %v1232, 0.0
      %1239 = vadd.xlane.f32.xlu0 %v1238
      %v1240 = vpop.xlane.xlu0 %1239
      %v1241 = vsel %vm595, %v1233, 0.0
      %1242 = vadd.xlane.f32.xlu0 %v1241
      %v1243 = vpop.xlane.xlu0 %1242
      %v1244 = vsel %vm595, %v1234, 0.0
      %1245 = vadd.xlane.f32.xlu0 %v1244
      %v1246 = vpop.xlane.xlu0 %1245
      %v1247 = vmul.f32 %v1237, %v1222
      %v1248 = vmul.f32 %v1240, %v1222
      %v1249 = vmul.f32 %v1243, %v1222
      %v1250 = vmul.f32 %v1246, %v1222
      %v1251 = vadd.f32 %v1247, 1e-05
      %v1252 = vadd.f32 %v1248, 1e-05
      %v1253 = vadd.f32 %v1249, 1e-05
      %v1254 = vadd.f32 %v1250, 1e-05
      %v1255 = vrsqrt.pop %v1251
      %v1256 = vmul.f32 %v1255, %v1251
      %v1257 = vmul.f32 %v1256, %v1255
      %v1258 = vmul.f32 0.5, %v1257
      %v1259 = vsub.f32 1.5, %v1258
      %v1260 = vmul.f32 %v1255, %v1259
      %vm1261 = vweird.f32 %v1251
      %vm1262 = vweird.f32 %v1255
      %vm1263 = vmor %vm1261, %vm1262
      %v1264 = vsel %vm1263, %v1255, %v1260
      %v1265 = vrsqrt.pop %v1252
      %v1266 = vmul.f32 %v1265, %v1252
      %v1267 = vmul.f32 %v1266, %v1265
      %v1268 = vmul.f32 0.5, %v1267
      %v1269 = vsub.f32 1.5, %v1268
      %v1270 = vmul.f32 %v1265, %v1269
      %vm1271 = vweird.f32 %v1252
      %vm1272 = vweird.f32 %v1265
      %vm1273 = vmor %vm1271, %vm1272
      %v1274 = vsel %vm1273, %v1265, %v1270
      %v1275 = vrsqrt.pop %v1253
      %v1276 = vmul.f32 %v1275, %v1253
      %v1277 = vmul.f32 %v1276, %v1275
      %v1278 = vmul.f32 0.5, %v1277
      %v1279 = vsub.f32 1.5, %v1278
      %v1280 = vmul.f32 %v1275, %v1279
      %vm1281 = vweird.f32 %v1253
      %vm1282 = vweird.f32 %v1275
      %vm1283 = vmor %vm1281, %vm1282
      %v1284 = vsel %vm1283, %v1275, %v1280
      %v1285 = vrsqrt.pop %v1254
      %v1286 = vmul.f32 %v1285, %v1254
      %v1287 = vmul.f32 %v1286, %v1285
      %v1288 = vmul.f32 0.5, %v1287
      %v1289 = vsub.f32 1.5, %v1288
      %v1290 = vmul.f32 %v1285, %v1289
      %vm1291 = vweird.f32 %v1254
      %vm1292 = vweird.f32 %v1285
      %vm1293 = vmor %vm1291, %vm1292
      %v1294 = vsel %vm1293, %v1285, %v1290
      %v1295 = vmul.f32 %v1227, %v1264
      %v1296 = vmul.f32 %v1228, %v1274
      %v1297 = vmul.f32 %v1229, %v1284
      %v1298 = vmul.f32 %v1230, %v1294
      %v1299 = vperm.slane %v1199, 3
      %v1300 = vmul.f32 %v1295, %v1299
      %v1301 = vmul.f32 %v1296, %v1299
      %v1302 = vmul.f32 %v1297, %v1299
      %v1303 = vmul.f32 %v1298, %v1299
      %v1304 = vperm.slane %v1199, 4
      %v1305 = vadd.f32 %v1300, %v1304
      %v1306 = vadd.f32 %v1301, %v1304
      %v1307 = vadd.f32 %v1302, %v1304
      %v1308 = vadd.f32 %v1303, %v1304
      %v1309 = vpack.c.bf16 %v1306, %v1305
      %v1310 = vpack.c.bf16 %v1308, %v1307
      %v1311 = vld [vmem:[%s327] sm:$0xf]
      %v1312 = vld [vmem:[%s327 + $0x4] sm:$0xf]
      %v1313 = vld [vmem:[%s327 + $0x8] sm:$0xf]
      %v1314 = vld [vmem:[%s327 + $0xc] sm:$0xf]
      %v1315 = vperm.slane %v1199, 0
      %v1320 = vunpack.c.l.b16 %v1311
      %v1321 = vunpack.c.l.b16 %v1312
      %v1322 = vunpack.c.l.b16 %v1313
      %v1323 = vunpack.c.l.b16 %v1314
      %v1324 = vpack.c.b16 %v1321, %v1320
      %v1325 = vpack.c.b16 %v1323, %v1322
      %v1329 = vsel %vm595, %v1309, 0
      %v1332 = vsel %vm595, %v1310, 0
      %1334 = vmatpush.bf16.msra.mxu0 0
      %1335 = vmatpush.bf16.msra.mxu0 0
      %1336 = vmatpush.bf16.msra.mxu0 0
      %1337 = vmatpush.bf16.msra.mxu0 0
      %1338 = vmatpush.bf16.msra.mxu0 0
      %1339 = vmatpush.bf16.msra.mxu0 0
      %1340 = vmatpush.bf16.msra.mxu0 %v1325
      %1341 = vmatpush.bf16.msra.mxu0 %v1324
      %1342 = vmatmul.bf16.gmra.mxu0 %v1329
      %v1343 = vpop.f32.mrf.mxu0
      %v1344 = vadd.f32 %v1315, %v1343
      %v1345 = vpop.f32.mrf.mxu0
      %v1346 = vadd.f32 %v1315, %v1345
      %1347 = vmatmul.bf16.gmra.mxu0 %v1332
      %v1348 = vpop.f32.mrf.mxu0
      %v1349 = vadd.f32 %v1315, %v1348
      %v1350 = vpop.f32.mrf.mxu0
      %v1351 = vadd.f32 %v1315, %v1350
      %1352 = vdwg.mxu0
      %vm1353 = vcmp.ge.f32.partialorder %v1344, 0.0
      %vm1354 = vcmp.ge.f32.partialorder %v1346, 0.0
      %vm1355 = vcmp.ge.f32.partialorder %v1349, 0.0
      %vm1356 = vcmp.ge.f32.partialorder %v1351, 0.0
      %v1357 = vperm.slane %v1199, 1
      %v1358 = vmul.f32 %v1357, %v1344
      %v1359 = vmul.f32 %v1357, %v1346
      %v1360 = vmul.f32 %v1357, %v1349
      %v1361 = vmul.f32 %v1357, %v1351
      %v1362 = vsel %vm1353, %v1344, %v1358
      %v1363 = vsel %vm1354, %v1346, %v1359
      %v1364 = vsel %vm1355, %v1349, %v1360
      %v1365 = vsel %vm1356, %v1351, %v1361
      %v1366 = vpack.c.bf16 %v1363, %v1362
      %v1367 = vpack.c.bf16 %v1365, %v1364
      %v1368 = vld [vmem:[%s332] sm:$0xf]
      %v1369 = vld [vmem:[%s332 + $0x4] sm:$0xf]
      %v1370 = vld [vmem:[%s332 + $0x8] sm:$0xf]
      %v1371 = vld [vmem:[%s332 + $0xc] sm:$0xf]
      %v1372 = vld [vmem:[%s332 + $0x10] sm:$0xf]
      %v1373 = vld [vmem:[%s332 + $0x14] sm:$0xf]
      %v1374 = vld [vmem:[%s332 + $0x18] sm:$0xf]
      %v1375 = vld [vmem:[%s332 + $0x1c] sm:$0xf]
      %v1376 = vld [vmem:[%s332 + $0x20] sm:$0xf]
      %v1377 = vld [vmem:[%s332 + $0x24] sm:$0xf]
      %v1378 = vld [vmem:[%s332 + $0x28] sm:$0xf]
      %v1379 = vld [vmem:[%s332 + $0x2c] sm:$0xf]
      %v1380 = vld [vmem:[%s332 + $0x30] sm:$0xf]
      %v1381 = vld [vmem:[%s332 + $0x34] sm:$0xf]
      %v1382 = vld [vmem:[%s332 + $0x38] sm:$0xf]
      %v1383 = vld [vmem:[%s332 + $0x3c] sm:$0xf]
      %v1384 = vperm.slane %v1199, 2
      %v1401 = vunpack.c.l.b16 %v1368
      %v1402 = vunpack.c.l.b16 %v1369
      %v1403 = vunpack.c.l.b16 %v1370
      %v1404 = vunpack.c.l.b16 %v1371
      %v1405 = vunpack.c.l.b16 %v1372
      %v1406 = vunpack.c.l.b16 %v1373
      %v1407 = vunpack.c.l.b16 %v1374
      %v1408 = vunpack.c.l.b16 %v1375
      %v1409 = vunpack.c.l.b16 %v1376
      %v1410 = vunpack.c.l.b16 %v1377
      %v1411 = vunpack.c.l.b16 %v1378
      %v1412 = vunpack.c.l.b16 %v1379
      %v1413 = vunpack.c.l.b16 %v1380
      %v1414 = vunpack.c.l.b16 %v1381
      %v1415 = vunpack.c.l.b16 %v1382
      %v1416 = vunpack.c.l.b16 %v1383
      %v1417 = vpack.c.b16 %v1402, %v1401
      %v1418 = vpack.c.b16 %v1404, %v1403
      %v1419 = vpack.c.b16 %v1406, %v1405
      %v1420 = vpack.c.b16 %v1408, %v1407
      %v1421 = vpack.c.b16 %v1410, %v1409
      %v1422 = vpack.c.b16 %v1412, %v1411
      %v1423 = vpack.c.b16 %v1414, %v1413
      %v1424 = vpack.c.b16 %v1416, %v1415
      %1433 = vmatpush.bf16.msra.mxu0 %v1424
      %1434 = vmatpush.bf16.msra.mxu0 %v1423
      %1435 = vmatpush.bf16.msra.mxu0 %v1422
      %1436 = vmatpush.bf16.msra.mxu0 %v1421
      %1437 = vmatpush.bf16.msra.mxu0 %v1420
      %1438 = vmatpush.bf16.msra.mxu0 %v1419
      %1439 = vmatpush.bf16.msra.mxu0 %v1418
      %1440 = vmatpush.bf16.msra.mxu0 %v1417
      %1441 = vmatmul.bf16.gmra.mxu0 %v1366
      %v1442 = vpop.f32.mrf.mxu0
      %v1443 = vadd.f32 %v1384, %v1442
      %v1444 = vpop.f32.mrf.mxu0
      %v1445 = vadd.f32 %v1384, %v1444
      %1446 = vmatmul.bf16.gmra.mxu0 %v1367
      %v1447 = vpop.f32.mrf.mxu0
      %v1448 = vadd.f32 %v1384, %v1447
      %v1449 = vpop.f32.mrf.mxu0
      %v1450 = vadd.f32 %v1384, %v1449
      %1451 = vdwg.mxu0
      %v1452 = vadd.f32 %v1305, %v1443
      %v1453 = vadd.f32 %v1306, %v1445
      %v1454 = vadd.f32 %v1307, %v1448
      %v1455 = vadd.f32 %v1308, %v1450
      %v1456 = vsel %vm595, %v1452, 0.0
      %1457 = vadd.xlane.f32.xlu0 %v1456
      %v1458 = vpop.xlane.xlu0 %1457
      %v1459 = vsel %vm595, %v1453, 0.0
      %1460 = vadd.xlane.f32.xlu0 %v1459
      %v1461 = vpop.xlane.xlu0 %1460
      %v1462 = vsel %vm595, %v1454, 0.0
      %1463 = vadd.xlane.f32.xlu0 %v1462
      %v1464 = vpop.xlane.xlu0 %1463
      %v1465 = vsel %vm595, %v1455, 0.0
      %1466 = vadd.xlane.f32.xlu0 %v1465
      %v1467 = vpop.xlane.xlu0 %1466
      %v1468 = vmul.f32 %v1458, %v1222
      %v1469 = vmul.f32 %v1461, %v1222
      %v1470 = vmul.f32 %v1464, %v1222
      %v1471 = vmul.f32 %v1467, %v1222
      %v1472 = vsub.f32 %v1452, %v1468
      %v1473 = vsub.f32 %v1453, %v1469
      %v1474 = vsub.f32 %v1454, %v1470
      %v1475 = vsub.f32 %v1455, %v1471
      %v1476 = vmul.f32 %v1472, %v1472
      %v1477 = vmul.f32 %v1473, %v1473
      %v1478 = vmul.f32 %v1474, %v1474
      %v1479 = vmul.f32 %v1475, %v1475
      %v1480 = vsel %vm595, %v1476, 0.0
      %1481 = vadd.xlane.f32.xlu0 %v1480
      %v1482 = vpop.xlane.xlu0 %1481
      %v1483 = vsel %vm595, %v1477, 0.0
      %1484 = vadd.xlane.f32.xlu0 %v1483
      %v1485 = vpop.xlane.xlu0 %1484
      %v1486 = vsel %vm595, %v1478, 0.0
      %1487 = vadd.xlane.f32.xlu0 %v1486
      %v1488 = vpop.xlane.xlu0 %1487
      %v1489 = vsel %vm595, %v1479, 0.0
      %1490 = vadd.xlane.f32.xlu0 %v1489
      %v1491 = vpop.xlane.xlu0 %1490
      %v1492 = vmul.f32 %v1482, %v1222
      %v1493 = vmul.f32 %v1485, %v1222
      %v1494 = vmul.f32 %v1488, %v1222
      %v1495 = vmul.f32 %v1491, %v1222
      %v1496 = vadd.f32 %v1492, 1e-05
      %v1497 = vadd.f32 %v1493, 1e-05
      %v1498 = vadd.f32 %v1494, 1e-05
      %v1499 = vadd.f32 %v1495, 1e-05
      %v1500 = vrsqrt.pop %v1496
      %v1501 = vmul.f32 %v1500, %v1496
      %v1502 = vmul.f32 %v1501, %v1500
      %v1503 = vmul.f32 0.5, %v1502
      %v1504 = vsub.f32 1.5, %v1503
      %v1505 = vmul.f32 %v1500, %v1504
      %vm1506 = vweird.f32 %v1496
      %vm1507 = vweird.f32 %v1500
      %vm1508 = vmor %vm1506, %vm1507
      %v1509 = vsel %vm1508, %v1500, %v1505
      %v1510 = vrsqrt.pop %v1497
      %v1511 = vmul.f32 %v1510, %v1497
      %v1512 = vmul.f32 %v1511, %v1510
      %v1513 = vmul.f32 0.5, %v1512
      %v1514 = vsub.f32 1.5, %v1513
      %v1515 = vmul.f32 %v1510, %v1514
      %vm1516 = vweird.f32 %v1497
      %vm1517 = vweird.f32 %v1510
      %vm1518 = vmor %vm1516, %vm1517
      %v1519 = vsel %vm1518, %v1510, %v1515
      %v1520 = vrsqrt.pop %v1498
      %v1521 = vmul.f32 %v1520, %v1498
      %v1522 = vmul.f32 %v1521, %v1520
      %v1523 = vmul.f32 0.5, %v1522
      %v1524 = vsub.f32 1.5, %v1523
      %v1525 = vmul.f32 %v1520, %v1524
      %vm1526 = vweird.f32 %v1498
      %vm1527 = vweird.f32 %v1520
      %vm1528 = vmor %vm1526, %vm1527
      %v1529 = vsel %vm1528, %v1520, %v1525
      %v1530 = vrsqrt.pop %v1499
      %v1531 = vmul.f32 %v1530, %v1499
      %v1532 = vmul.f32 %v1531, %v1530
      %v1533 = vmul.f32 0.5, %v1532
      %v1534 = vsub.f32 1.5, %v1533
      %v1535 = vmul.f32 %v1530, %v1534
      %vm1536 = vweird.f32 %v1499
      %vm1537 = vweird.f32 %v1530
      %vm1538 = vmor %vm1536, %vm1537
      %v1539 = vsel %vm1538, %v1530, %v1535
      %v1540 = vmul.f32 %v1472, %v1509
      %v1541 = vmul.f32 %v1473, %v1519
      %v1542 = vmul.f32 %v1474, %v1529
      %v1543 = vmul.f32 %v1475, %v1539
      %v1544 = vmul.f32 %v1540, %v1299
      %v1545 = vmul.f32 %v1541, %v1299
      %v1546 = vmul.f32 %v1542, %v1299
      %v1547 = vmul.f32 %v1543, %v1299
      %v1548 = vadd.f32 %v1544, %v1304
      %v1549 = vadd.f32 %v1545, %v1304
      %v1550 = vadd.f32 %v1546, %v1304
      %v1551 = vadd.f32 %v1547, %v1304
      %1552 = vst.msk [vmem:[%s572] sm:$0xff] %vm595, %v1548
      %1553 = vst.msk [vmem:[%s572 + $0x8] sm:$0xff] %vm595, %v1549
      %1554 = vst.msk [vmem:[%s572 + $0x10] sm:$0xff] %vm595, %v1550
      %1555 = vst.msk [vmem:[%s572 + $0x18] sm:$0xff] %vm595, %v1551
      %p1556 = scmp.eq.s32.totalorder %s22, 1
      // Predicated region
      $region73: #{tpu_custom_call.1} parent=43 // pred_check
        %p1557 = pneg %p1556
      $region74: #{tpu_custom_call.1} parent=43 // pred_check_branch
        %1559 = sbr.rel (%p1557) target = $region76
      $region75: #{tpu_custom_call.1} parent=43 // pred_region
        %1560 = vst.msk [vmem:[%s341] sm:$0xff] %vm595, %v1548
        %1561 = vst.msk [vmem:[%s341 + $0x8] sm:$0xff] %vm595, %v1549
        %1562 = vst.msk [vmem:[%s341 + $0x10] sm:$0xff] %vm595, %v1550
        %1563 = vst.msk [vmem:[%s341 + $0x18] sm:$0xff] %vm595, %v1551
      $region76: #{tpu_custom_call.1} parent=43 // pred_fallthru
        _
      %s1564 = smul.u32 4, %s23
      %p1565 = scmp.lt.s32.totalorder %s1564, 7
      %s1566 = scalar_select %p1565, %s1564, 7
      %s1567 = smul.addr %s1566, 8
      %s1568 = scalar_lea.vmem %s7, %s1567
      // Predicated region
      $region77: #{tpu_custom_call.1} parent=43 // pred_check
        %p1569 = pneg %p199
      $region78: #{tpu_custom_call.1} parent=43 // pred_check_branch
        %1571 = sbr.rel (%p1569) target = $region80
      $region79: #{tpu_custom_call.1} parent=43 // pred_region
        %s1572 = smul.u32 4, %s23
      $region80: #{tpu_custom_call.1} parent=43 // pred_fallthru
        _
    $region44: #{tpu_custom_call.1} parent=5 // pred_fallthru
      _
    %p1573 = scmp.le.s32.totalorder 2, %s13
    // Predicated region
    $region81: #{tpu_custom_call.1} parent=5 // pred_check
      %p1574 = pneg %p1573
    $region82: #{tpu_custom_call.1} parent=5 // pred_check_branch
      %1576 = sbr.rel (%p1574) target = $region84
    $region83: #{tpu_custom_call.1} parent=5 // pred_region
      %s1577 = ssub.s32 %s13, 2
      // Predicated region
      $region85: #{tpu_custom_call.1} parent=83 // pred_check
        %p1578 = pneg %p205
      $region86: #{tpu_custom_call.1} parent=83 // pred_check_branch
        %1580 = sbr.rel (%p1578) target = $region88
      $region87: #{tpu_custom_call.1} parent=83 // pred_region
        %s1581 = smul.u32 4, %s25
        %p1582 = scmp.lt.s32.totalorder %s1581, 7
        %s1583 = scalar_select %p1582, %s1581, 7
        %s1584 = smul.addr %s1583, 8
        %s1585 = scalar_lea.vmem %s7, %s1584
      $region88: #{tpu_custom_call.1} parent=83 // pred_fallthru
        _
    $region84: #{tpu_custom_call.1} parent=5 // pred_fallthru
      _
  $region6: #{tpu_custom_call.1} parent=0 // loop_footer
    %s17 = sadd.s32 1, %s13
  $region7: #{tpu_custom_call.1} parent=0 // loop_footer_branch
    %12 = sbr.rel target = $region3
  $region8: #{tpu_custom_call.1} parent=0 // loop_exit
    _

</llo_original>
